<compile_context>
chip_gen: v7x
topology: tpu7x:2x2x1
jax: 0.10.0
libtpu: 0.0.40
codegen_flags: <defaults>
</compile_context>

<pallas_src>
import math

import jax
import jax.numpy as jnp
import numpy as np
from jax.experimental import pallas as pl
from jax.experimental.pallas import tpu as pltpu

# 3x3 tap offsets, row-major (dy, dx) -- matches PyTorch / HWIO weight order.
_TAPS = tuple((dy, dx) for dy in (-1, 0, 1) for dx in (-1, 0, 1))
# Tap indices used by the separable max-pool.
_T_UP, _T_DN, _T_LF, _T_RT = 1, 7, 3, 5       # (-1,0), (1,0), (0,-1), (0,1)


def _build_valid_mask(H, W):
    """(9, H*W) f32 mask: 1.0 where the tap's neighbour lies inside the image."""
    yy, xx = np.meshgrid(np.arange(H), np.arange(W), indexing="ij")
    rows = []
    for dy, dx in _TAPS:
        ok = ((yy + dy >= 0) & (yy + dy < H) &
              (xx + dx >= 0) & (xx + dx < W))
        rows.append(ok.reshape(-1))
    return jnp.asarray(np.stack(rows).astype(np.float32))


# ----------------------------------------------------------------------------
# Pallas kernel: one batch element per grid step, (C, H*W) layout.
# ----------------------------------------------------------------------------
def _make_kernel(H, W, c1, c3, c5, cp):
    HW = H * W

    def kernel(x_ref, valid_ref,
               wf_ref, bf_ref,      # fused 1x1: (c1+c3+c5, Cin) bf16 / (c1+c3+c5, 1) f32
               w3_ref, b3_ref,      # 3x3 branch: (c3, 9*c3) bf16 / (c3, 1) f32
               w5_ref, b5_ref,      # "5x5" branch (really 3x3): (c5, 9*c5) bf16 / (c5, 1) f32
               wp_ref, bp_ref,      # pool branch 1x1: (cp, Cin) bf16 / (cp, 1) f32
               out_ref,
               patch3_ref, patch5_ref):
        x_bf = x_ref[0]                      # (Cin, HW) bf16
        valid = valid_ref[...]               # (9, HW)  f32

        def shift(a, t):
            # a[:, p + dy*W + dx] (circular); out-of-image lanes handled by mask.
            dy, dx = _TAPS[t]
            s = (-(dy * W + dx)) % HW
            return a if s == 0 else pltpu.roll(a, s, 1)

        # ---- fused 1x1 convs: single (c1+c3+c5, Cin) x (Cin, HW) MXU matmul ----
        y = jnp.dot(wf_ref[...], x_bf, preferred_element_type=jnp.float32)
        y = jnp.maximum(y + bf_ref[...], 0.0)            # bias + ReLU in f32
        o1 = y[0:c1, :]
        h35 = y[c1:c1 + c3 + c5, :]                      # reducer outputs, both branches

        # ---- shared im2col: roll/mask the combined (c3+c5, HW) block once per
        # tap and scatter its rows into the two per-branch patch matrices. ----
        for t in range(9):
            contrib = shift(h35, t)
            if _TAPS[t] != (0, 0):
                contrib = contrib * valid[t:t + 1, :]    # zero fill at borders
            patch3_ref[t * c3:(t + 1) * c3, :] = contrib[0:c3, :]
            patch5_ref[t * c5:(t + 1) * c5, :] = contrib[c3:c3 + c5, :]

        def mm_bias_relu(w_ref, p_ref, b_ref):
            acc = jnp.dot(w_ref[...], p_ref[...].astype(jnp.bfloat16),
                          preferred_element_type=jnp.float32)
            return jnp.maximum(acc + b_ref[...], 0.0)

        o3 = mm_bias_relu(w3_ref, patch3_ref, b3_ref)    # one matmul, K = 9*c3
        o5 = mm_bias_relu(w5_ref, patch5_ref, b5_ref)    # one matmul, K = 9*c5

        # ---- 3x3 max-pool (stride 1, pad 1), SEPARABLE: row-max then col-max.
        #      4 rolls + 4 masked selects + 4 maxes instead of 8 of each. ----
        x_f32 = x_bf.astype(jnp.float32)

        def masked(t, a):
            return jnp.where(valid[t:t + 1, :] > 0.5, shift(a, t), -jnp.inf)

        rmax = jnp.maximum(x_f32,
                           jnp.maximum(masked(_T_UP, x_f32), masked(_T_DN, x_f32)))
        pooled = jnp.maximum(rmax,
                             jnp.maximum(masked(_T_LF, rmax), masked(_T_RT, rmax)))
        op = jnp.dot(wp_ref[...], pooled.astype(jnp.bfloat16),
                     preferred_element_type=jnp.float32)
        op = jnp.maximum(op + bp_ref[...], 0.0)

        # ---- write each branch into its static output-channel slice (no concat) ----
        out_ref[0, 0:c1, :] = o1
        out_ref[0, c1:c1 + c3, :] = o3
        out_ref[0, c1 + c3:c1 + c3 + c5, :] = o5
        out_ref[0, c1 + c3 + c5:c1 + c3 + c5 + cp, :] = op

    return kernel


# ----------------------------------------------------------------------------
# Wrapper: NCHW in / NCHW out (no transposes, only reshapes).
# ----------------------------------------------------------------------------
def inception_block_forward(x_nchw, params):
    N, Cin, H, W = x_nchw.shape
    HW = H * W
    c1 = params["w1"].shape[1]
    c3 = params["w3b"].shape[2]
    c5 = params["w5b"].shape[2]
    cp = params["wp"].shape[1]
    c_total = c1 + c3 + c5 + cp

    bf16 = jnp.bfloat16
    # Fuse the three input-side 1x1 convolutions into one weight matrix.
    w_fused = jnp.concatenate(
        [params["w1"].T, params["w3a"].T, params["w5a"].T], axis=0).astype(bf16)
    b_fused = jnp.concatenate(
        [params["b1"], params["b3a"], params["b5a"]],
        axis=1).reshape(-1, 1).astype(jnp.float32)
    # 3x3 weights reshaped for the im2col contraction: (Co, 9*Cm).
    w3_r = jnp.transpose(params["w3b"], (2, 0, 1)).reshape(c3, 9 * c3).astype(bf16)
    b3 = params["b3b"].reshape(-1, 1).astype(jnp.float32)
    w5_r = jnp.transpose(params["w5b"], (2, 0, 1)).reshape(c5, 9 * c5).astype(bf16)
    b5 = params["b5b"].reshape(-1, 1).astype(jnp.float32)
    wp_t = params["wp"].T.astype(bf16)
    bp = params["bp"].reshape(-1, 1).astype(jnp.float32)

    valid = _build_valid_mask(H, W)                      # (9, HW) f32

    # Lane-dense layout: keep NCHW, just flatten the spatial dims onto lanes.
    x = x_nchw.reshape(N, Cin, HW).astype(bf16)

    consts = [valid, w_fused, b_fused, w3_r, b3, w5_r, b5, wp_t, bp]
    in_specs = [pl.BlockSpec((1, Cin, HW), lambda b: (b, 0, 0))]
    for a in consts:
        # Full-array blocks, same block every grid step (weights stay resident).
        # NOTE: for production inception sizes, additionally add halo'd row
        # tiling (grid=(N, H//TH)) for v7x's 64 MiB VMEM and re-tune
        # vmem_limit_bytes.
        in_specs.append(pl.BlockSpec(a.shape, lambda b, _n=a.ndim: (0,) * _n))

    out = pl.pallas_call(
        _make_kernel(H, W, c1, c3, c5, cp),
        out_shape=jax.ShapeDtypeStruct((N, c_total, HW), jnp.float32),
        grid=(N,),
        in_specs=in_specs,
        out_specs=pl.BlockSpec((1, c_total, HW), lambda b: (b, 0, 0)),
        scratch_shapes=[pltpu.VMEM((9 * c3, HW), jnp.float32),
                        pltpu.VMEM((9 * c5, HW), jnp.float32)],
        compiler_params=pltpu.CompilerParams(
            dimension_semantics=("parallel",),
            vmem_limit_bytes=32 * 1024 * 1024),
    )(x, *consts)
    return out.reshape(N, c_total, H, W)


# ----------------------------------------------------------------------------
# Deterministic parameter init (same channel-split arithmetic as the module).
# ----------------------------------------------------------------------------
def init_params(key, in_channels, out_channels):
    c3 = math.floor(out_channels * 0.5)
    rest = math.ceil(out_channels * 0.5)
    c1 = math.floor(rest * 0.5)
    c5p = math.ceil(rest * 0.5)
    c5 = math.floor(c5p * 0.5)
    cp = math.ceil(c5p * 0.5)

    ks = jax.random.split(key, 12)

    def u(k, shape, fan_in):
        bound = 1.0 / math.sqrt(fan_in)
        return jax.random.uniform(k, shape, jnp.float32, -bound, bound)

    return {
        "w1":  u(ks[0], (in_channels, c1), in_channels),
        "b1":  u(ks[1], (1, c1), in_channels),
        "w3a": u(ks[2], (in_channels, c3), in_channels),
        "b3a": u(ks[3], (1, c3), in_channels),
        "w3b": u(ks[4], (9, c3, c3), 9 * c3),
        "b3b": u(ks[5], (1, c3), 9 * c3),
        "w5a": u(ks[6], (in_channels, c5), in_channels),
        "b5a": u(ks[7], (1, c5), in_channels),
        "w5b": u(ks[8], (9, c5, c5), 9 * c5),
        "b5b": u(ks[9], (1, c5), 9 * c5),
        "wp":  u(ks[10], (in_channels, cp), in_channels),
        "bp":  u(ks[11], (1, cp), in_channels),
    }


# ----------------------------------------------------------------------------
# Pure-JAX f32 reference (lax.conv / reduce_window) for validation.
# ----------------------------------------------------------------------------
def reference_forward(x_nchw, p):
    x = jnp.transpose(x_nchw, (0, 2, 3, 1)).astype(jnp.float32)

    def c1x1(h, w, b):
        return jax.nn.relu(jnp.einsum("nhwc,cd->nhwd", h, w) + b.reshape(-1))

    def c3x3(h, w9, b):
        w = w9.reshape(3, 3, w9.shape[1], w9.shape[2])
        y = jax.lax.conv_general_dilated(
            h, w, (1, 1), "SAME",
            dimension_numbers=("NHWC", "HWIO", "NHWC"))
        return jax.nn.relu(y + b.reshape(-1))

    o1 = c1x1(x, p["w1"], p["b1"])
    o3 = c3x3(c1x1(x, p["w3a"], p["b3a"]), p["w3b"], p["b3b"])
    o5 = c3x3(c1x1(x, p["w5a"], p["b5a"]), p["w5b"], p["b5b"])
    pooled = jax.lax.reduce_window(x, -jnp.inf, jax.lax.max,
                                   (1, 3, 3, 1), (1, 1, 1, 1), "SAME")
    op = c1x1(pooled, p["wp"], p["bp"])
    out = jnp.concatenate([o1, o3, o5, op], axis=-1)
    return jnp.transpose(out, (0, 3, 1, 2))


if __name__ == "__main__":
    key = jax.random.PRNGKey(0)
    kx, kp = jax.random.split(key)

    N, Cin, H, W = 2, 4, 16, 16
    out_channels = 8

    x = jax.random.normal(kx, (N, Cin, H, W), jnp.float32)
    params = init_params(kp, Cin, out_channels)

    y = inception_block_forward(x, params)
    y = jax.block_until_ready(y)

    y_ref = reference_forward(x, params)
    assert y.shape == y_ref.shape == (N, out_channels, H, W), (y.shape, y_ref.shape)
    # bf16 MXU operands with f32 accumulation -> loosened tolerance vs f32 ref.
    np.testing.assert_allclose(np.asarray(y), np.asarray(y_ref),
                               atol=3e-2, rtol=3e-2)
    print("KERNEL_OK")
</pallas_src>

<mosaic_0001>
module attributes {stable_mosaic.version = 11 : i64} {
  func.func @kernel(%arg0: i32, %arg1: memref<1x4x256xbf16, #tpu.memory_space<vmem>>, %arg2: memref<9x256xf32, #tpu.memory_space<vmem>>, %arg3: memref<7x4xbf16, #tpu.memory_space<vmem>>, %arg4: memref<7x1xf32, #tpu.memory_space<vmem>>, %arg5: memref<4x36xbf16, #tpu.memory_space<vmem>>, %arg6: memref<4x1xf32, #tpu.memory_space<vmem>>, %arg7: memref<1x9xbf16, #tpu.memory_space<vmem>>, %arg8: memref<1x1xf32, #tpu.memory_space<vmem>>, %arg9: memref<1x4xbf16, #tpu.memory_space<vmem>>, %arg10: memref<1x1xf32, #tpu.memory_space<vmem>>, %arg11: memref<1x8x256xf32, #tpu.memory_space<vmem>>, %arg12: memref<36x256xf32, #tpu.memory_space<vmem>>, %arg13: memref<9x256xf32, #tpu.memory_space<vmem>>) attributes {dimension_semantics = [#tpu.dimension_semantics<parallel>], iteration_bounds = array<i64: 2>, scalar_prefetch = 0 : i64, scratch_operands = 2 : i64, tpu.core_type = #tpu.core_type<tc>, window_params = [{transform_indices = @transform_0, window_bounds = array<i64: 1, 4, 256>}, {pipeline_mode = #tpu.pipeline_mode<synchronous>, transform_indices = @transform_1, window_bounds = array<i64: 9, 256>}, {pipeline_mode = #tpu.pipeline_mode<synchronous>, transform_indices = @transform_2, window_bounds = array<i64: 7, 4>}, {pipeline_mode = #tpu.pipeline_mode<synchronous>, transform_indices = @transform_3, window_bounds = array<i64: 7, 1>}, {pipeline_mode = #tpu.pipeline_mode<synchronous>, transform_indices = @transform_4, window_bounds = array<i64: 4, 36>}, {pipeline_mode = #tpu.pipeline_mode<synchronous>, transform_indices = @transform_5, window_bounds = array<i64: 4, 1>}, {pipeline_mode = #tpu.pipeline_mode<synchronous>, transform_indices = @transform_6, window_bounds = array<i64: 1, 9>}, {pipeline_mode = #tpu.pipeline_mode<synchronous>, transform_indices = @transform_7, window_bounds = array<i64: 1, 1>}, {pipeline_mode = #tpu.pipeline_mode<synchronous>, transform_indices = @transform_8, window_bounds = array<i64: 1, 4>}, {pipeline_mode = #tpu.pipeline_mode<synchronous>, transform_indices = @transform_9, window_bounds = array<i64: 1, 1>}, {transform_indices = @transform_10, window_bounds = array<i64: 1, 8, 256>}]} {
    %c0 = arith.constant 0 : index
    %c0_0 = arith.constant 0 : index
    %c0_1 = arith.constant 0 : index
    %0 = vector.load %arg1[%c0, %c0_0, %c0_1] : memref<1x4x256xbf16, #tpu.memory_space<vmem>>, vector<1x4x256xbf16>
    %1 = vector.shape_cast %0 : vector<1x4x256xbf16> to vector<4x256xbf16>
    %c0_2 = arith.constant 0 : index
    %c0_3 = arith.constant 0 : index
    %2 = vector.load %arg2[%c0_2, %c0_3] : memref<9x256xf32, #tpu.memory_space<vmem>>, vector<9x256xf32>
    %c0_4 = arith.constant 0 : index
    %c0_5 = arith.constant 0 : index
    %3 = vector.load %arg3[%c0_4, %c0_5] : memref<7x4xbf16, #tpu.memory_space<vmem>>, vector<7x4xbf16>
    %cst = arith.constant dense<0.000000e+00> : vector<7x256xf32>
    %4 = tpu.matmul %3, %1, %cst {dimension_numbers = #tpu.dot_dimension_numbers<[1], [0], [0], [1], [0, 0, 1, 1], [], []>} : vector<7x4xbf16>, vector<4x256xbf16>, vector<7x256xf32> -> vector<7x256xf32>
    %c0_6 = arith.constant 0 : index
    %c0_7 = arith.constant 0 : index
    %5 = vector.load %arg4[%c0_6, %c0_7] : memref<7x1xf32, #tpu.memory_space<vmem>>, vector<7x1xf32>
    %6 = vector.broadcast %5 : vector<7x1xf32> to vector<7x256xf32>
    %7 = arith.addf %4, %6 : vector<7x256xf32>
    %cst_8 = arith.constant 0.000000e+00 : f32
    %8 = vector.broadcast %cst_8 : f32 to vector<7x256xf32>
    %9 = arith.maximumf %7, %8 : vector<7x256xf32>
    %10 = vector.extract_strided_slice %9 {offsets = [0, 0], sizes = [2, 256], strides = [1, 1]} : vector<7x256xf32> to vector<2x256xf32>
    %11 = vector.extract_strided_slice %9 {offsets = [2, 0], sizes = [5, 256], strides = [1, 1]} : vector<7x256xf32> to vector<5x256xf32>
    %c17_i32 = arith.constant 17 : i32
    %12 = tpu.dynamic_rotate %11 by %c17_i32 dim 1 : vector<5x256xf32>, i32 -> vector<5x256xf32>
    %13 = vector.extract_strided_slice %2 {offsets = [0, 0], sizes = [1, 256], strides = [1, 1]} : vector<9x256xf32> to vector<1x256xf32>
    %14 = vector.broadcast %13 : vector<1x256xf32> to vector<5x256xf32>
    %15 = arith.mulf %12, %14 : vector<5x256xf32>
    %16 = vector.extract_strided_slice %15 {offsets = [0, 0], sizes = [4, 256], strides = [1, 1]} : vector<5x256xf32> to vector<4x256xf32>
    %c0_9 = arith.constant 0 : index
    %c0_10 = arith.constant 0 : index
    %17 = vector.load %arg12[%c0_9, %c0_10] : memref<36x256xf32, #tpu.memory_space<vmem>>, vector<4x256xf32>
    tpu.vector_store %arg12[%c0_9, %c0_10], %16 {strides = array<i32>} : memref<36x256xf32, #tpu.memory_space<vmem>>, vector<4x256xf32>,
    %18 = vector.extract_strided_slice %15 {offsets = [4, 0], sizes = [1, 256], strides = [1, 1]} : vector<5x256xf32> to vector<1x256xf32>
    %c0_11 = arith.constant 0 : index
    %c0_12 = arith.constant 0 : index
    %19 = vector.load %arg13[%c0_11, %c0_12] : memref<9x256xf32, #tpu.memory_space<vmem>>, vector<1x256xf32>
    tpu.vector_store %arg13[%c0_11, %c0_12], %18 {strides = array<i32>} : memref<9x256xf32, #tpu.memory_space<vmem>>, vector<1x256xf32>,
    %c16_i32 = arith.constant 16 : i32
    %20 = tpu.dynamic_rotate %11 by %c16_i32 dim 1 : vector<5x256xf32>, i32 -> vector<5x256xf32>
    %21 = vector.extract_strided_slice %2 {offsets = [1, 0], sizes = [1, 256], strides = [1, 1]} : vector<9x256xf32> to vector<1x256xf32>
    %22 = vector.broadcast %21 : vector<1x256xf32> to vector<5x256xf32>
    %23 = arith.mulf %20, %22 : vector<5x256xf32>
    %24 = vector.extract_strided_slice %23 {offsets = [0, 0], sizes = [4, 256], strides = [1, 1]} : vector<5x256xf32> to vector<4x256xf32>
    %c4 = arith.constant 4 : index
    %c0_13 = arith.constant 0 : index
    %25 = vector.load %arg12[%c4, %c0_13] : memref<36x256xf32, #tpu.memory_space<vmem>>, vector<4x256xf32>
    tpu.vector_store %arg12[%c4, %c0_13], %24 {strides = array<i32>} : memref<36x256xf32, #tpu.memory_space<vmem>>, vector<4x256xf32>,
    %26 = vector.extract_strided_slice %23 {offsets = [4, 0], sizes = [1, 256], strides = [1, 1]} : vector<5x256xf32> to vector<1x256xf32>
    %c1 = arith.constant 1 : index
    %c0_14 = arith.constant 0 : index
    %27 = vector.load %arg13[%c1, %c0_14] : memref<9x256xf32, #tpu.memory_space<vmem>>, vector<1x256xf32>
    tpu.vector_store %arg13[%c1, %c0_14], %26 {strides = array<i32>} : memref<9x256xf32, #tpu.memory_space<vmem>>, vector<1x256xf32>,
    %c15_i32 = arith.constant 15 : i32
    %28 = tpu.dynamic_rotate %11 by %c15_i32 dim 1 : vector<5x256xf32>, i32 -> vector<5x256xf32>
    %29 = vector.extract_strided_slice %2 {offsets = [2, 0], sizes = [1, 256], strides = [1, 1]} : vector<9x256xf32> to vector<1x256xf32>
    %30 = vector.broadcast %29 : vector<1x256xf32> to vector<5x256xf32>
    %31 = arith.mulf %28, %30 : vector<5x256xf32>
    %32 = vector.extract_strided_slice %31 {offsets = [0, 0], sizes = [4, 256], strides = [1, 1]} : vector<5x256xf32> to vector<4x256xf32>
    %c8 = arith.constant 8 : index
    %c0_15 = arith.constant 0 : index
    %33 = vector.load %arg12[%c8, %c0_15] : memref<36x256xf32, #tpu.memory_space<vmem>>, vector<4x256xf32>
    tpu.vector_store %arg12[%c8, %c0_15], %32 {strides = array<i32>} : memref<36x256xf32, #tpu.memory_space<vmem>>, vector<4x256xf32>,
    %34 = vector.extract_strided_slice %31 {offsets = [4, 0], sizes = [1, 256], strides = [1, 1]} : vector<5x256xf32> to vector<1x256xf32>
    %c2 = arith.constant 2 : index
    %c0_16 = arith.constant 0 : index
    %35 = vector.load %arg13[%c2, %c0_16] : memref<9x256xf32, #tpu.memory_space<vmem>>, vector<1x256xf32>
    tpu.vector_store %arg13[%c2, %c0_16], %34 {strides = array<i32>} : memref<9x256xf32, #tpu.memory_space<vmem>>, vector<1x256xf32>,
    %c1_i32 = arith.constant 1 : i32
    %36 = tpu.dynamic_rotate %11 by %c1_i32 dim 1 : vector<5x256xf32>, i32 -> vector<5x256xf32>
    %37 = vector.extract_strided_slice %2 {offsets = [3, 0], sizes = [1, 256], strides = [1, 1]} : vector<9x256xf32> to vector<1x256xf32>
    %38 = vector.broadcast %37 : vector<1x256xf32> to vector<5x256xf32>
    %39 = arith.mulf %36, %38 : vector<5x256xf32>
    %40 = vector.extract_strided_slice %39 {offsets = [0, 0], sizes = [4, 256], strides = [1, 1]} : vector<5x256xf32> to vector<4x256xf32>
    %c12 = arith.constant 12 : index
    %c0_17 = arith.constant 0 : index
    %41 = vector.load %arg12[%c12, %c0_17] : memref<36x256xf32, #tpu.memory_space<vmem>>, vector<4x256xf32>
    tpu.vector_store %arg12[%c12, %c0_17], %40 {strides = array<i32>} : memref<36x256xf32, #tpu.memory_space<vmem>>, vector<4x256xf32>,
    %42 = vector.extract_strided_slice %39 {offsets = [4, 0], sizes = [1, 256], strides = [1, 1]} : vector<5x256xf32> to vector<1x256xf32>
    %c3 = arith.constant 3 : index
    %c0_18 = arith.constant 0 : index
    %43 = vector.load %arg13[%c3, %c0_18] : memref<9x256xf32, #tpu.memory_space<vmem>>, vector<1x256xf32>
    tpu.vector_store %arg13[%c3, %c0_18], %42 {strides = array<i32>} : memref<9x256xf32, #tpu.memory_space<vmem>>, vector<1x256xf32>,
    %44 = vector.extract_strided_slice %11 {offsets = [0, 0], sizes = [4, 256], strides = [1, 1]} : vector<5x256xf32> to vector<4x256xf32>
    %c16 = arith.constant 16 : index
    %c0_19 = arith.constant 0 : index
    %45 = vector.load %arg12[%c16, %c0_19] : memref<36x256xf32, #tpu.memory_space<vmem>>, vector<4x256xf32>
    tpu.vector_store %arg12[%c16, %c0_19], %44 {strides = array<i32>} : memref<36x256xf32, #tpu.memory_space<vmem>>, vector<4x256xf32>,
    %46 = vector.extract_strided_slice %11 {offsets = [4, 0], sizes = [1, 256], strides = [1, 1]} : vector<5x256xf32> to vector<1x256xf32>
    %c4_20 = arith.constant 4 : index
    %c0_21 = arith.constant 0 : index
    %47 = vector.load %arg13[%c4_20, %c0_21] : memref<9x256xf32, #tpu.memory_space<vmem>>, vector<1x256xf32>
    tpu.vector_store %arg13[%c4_20, %c0_21], %46 {strides = array<i32>} : memref<9x256xf32, #tpu.memory_space<vmem>>, vector<1x256xf32>,
    %c255_i32 = arith.constant 255 : i32
    %48 = tpu.dynamic_rotate %11 by %c255_i32 dim 1 : vector<5x256xf32>, i32 -> vector<5x256xf32>
    %49 = vector.extract_strided_slice %2 {offsets = [5, 0], sizes = [1, 256], strides = [1, 1]} : vector<9x256xf32> to vector<1x256xf32>
    %50 = vector.broadcast %49 : vector<1x256xf32> to vector<5x256xf32>
    %51 = arith.mulf %48, %50 : vector<5x256xf32>
    %52 = vector.extract_strided_slice %51 {offsets = [0, 0], sizes = [4, 256], strides = [1, 1]} : vector<5x256xf32> to vector<4x256xf32>
    %c20 = arith.constant 20 : index
    %c0_22 = arith.constant 0 : index
    %53 = vector.load %arg12[%c20, %c0_22] : memref<36x256xf32, #tpu.memory_space<vmem>>, vector<4x256xf32>
    tpu.vector_store %arg12[%c20, %c0_22], %52 {strides = array<i32>} : memref<36x256xf32, #tpu.memory_space<vmem>>, vector<4x256xf32>,
    %54 = vector.extract_strided_slice %51 {offsets = [4, 0], sizes = [1, 256], strides = [1, 1]} : vector<5x256xf32> to vector<1x256xf32>
    %c5 = arith.constant 5 : index
    %c0_23 = arith.constant 0 : index
    %55 = vector.load %arg13[%c5, %c0_23] : memref<9x256xf32, #tpu.memory_space<vmem>>, vector<1x256xf32>
    tpu.vector_store %arg13[%c5, %c0_23], %54 {strides = array<i32>} : memref<9x256xf32, #tpu.memory_space<vmem>>, vector<1x256xf32>,
    %c241_i32 = arith.constant 241 : i32
    %56 = tpu.dynamic_rotate %11 by %c241_i32 dim 1 : vector<5x256xf32>, i32 -> vector<5x256xf32>
    %57 = vector.extract_strided_slice %2 {offsets = [6, 0], sizes = [1, 256], strides = [1, 1]} : vector<9x256xf32> to vector<1x256xf32>
    %58 = vector.broadcast %57 : vector<1x256xf32> to vector<5x256xf32>
    %59 = arith.mulf %56, %58 : vector<5x256xf32>
    %60 = vector.extract_strided_slice %59 {offsets = [0, 0], sizes = [4, 256], strides = [1, 1]} : vector<5x256xf32> to vector<4x256xf32>
    %c24 = arith.constant 24 : index
    %c0_24 = arith.constant 0 : index
    %61 = vector.load %arg12[%c24, %c0_24] : memref<36x256xf32, #tpu.memory_space<vmem>>, vector<4x256xf32>
    tpu.vector_store %arg12[%c24, %c0_24], %60 {strides = array<i32>} : memref<36x256xf32, #tpu.memory_space<vmem>>, vector<4x256xf32>,
    %62 = vector.extract_strided_slice %59 {offsets = [4, 0], sizes = [1, 256], strides = [1, 1]} : vector<5x256xf32> to vector<1x256xf32>
    %c6 = arith.constant 6 : index
    %c0_25 = arith.constant 0 : index
    %63 = vector.load %arg13[%c6, %c0_25] : memref<9x256xf32, #tpu.memory_space<vmem>>, vector<1x256xf32>
    tpu.vector_store %arg13[%c6, %c0_25], %62 {strides = array<i32>} : memref<9x256xf32, #tpu.memory_space<vmem>>, vector<1x256xf32>,
    %c240_i32 = arith.constant 240 : i32
    %64 = tpu.dynamic_rotate %11 by %c240_i32 dim 1 : vector<5x256xf32>, i32 -> vector<5x256xf32>
    %65 = vector.extract_strided_slice %2 {offsets = [7, 0], sizes = [1, 256], strides = [1, 1]} : vector<9x256xf32> to vector<1x256xf32>
    %66 = vector.broadcast %65 : vector<1x256xf32> to vector<5x256xf32>
    %67 = arith.mulf %64, %66 : vector<5x256xf32>
    %68 = vector.extract_strided_slice %67 {offsets = [0, 0], sizes = [4, 256], strides = [1, 1]} : vector<5x256xf32> to vector<4x256xf32>
    %c28 = arith.constant 28 : index
    %c0_26 = arith.constant 0 : index
    %69 = vector.load %arg12[%c28, %c0_26] : memref<36x256xf32, #tpu.memory_space<vmem>>, vector<4x256xf32>
    tpu.vector_store %arg12[%c28, %c0_26], %68 {strides = array<i32>} : memref<36x256xf32, #tpu.memory_space<vmem>>, vector<4x256xf32>,
    %70 = vector.extract_strided_slice %67 {offsets = [4, 0], sizes = [1, 256], strides = [1, 1]} : vector<5x256xf32> to vector<1x256xf32>
    %c7 = arith.constant 7 : index
    %c0_27 = arith.constant 0 : index
    %71 = vector.load %arg13[%c7, %c0_27] : memref<9x256xf32, #tpu.memory_space<vmem>>, vector<1x256xf32>
    tpu.vector_store %arg13[%c7, %c0_27], %70 {strides = array<i32>} : memref<9x256xf32, #tpu.memory_space<vmem>>, vector<1x256xf32>,
    %c239_i32 = arith.constant 239 : i32
    %72 = tpu.dynamic_rotate %11 by %c239_i32 dim 1 : vector<5x256xf32>, i32 -> vector<5x256xf32>
    %73 = vector.extract_strided_slice %2 {offsets = [8, 0], sizes = [1, 256], strides = [1, 1]} : vector<9x256xf32> to vector<1x256xf32>
    %74 = vector.broadcast %73 : vector<1x256xf32> to vector<5x256xf32>
    %75 = arith.mulf %72, %74 : vector<5x256xf32>
    %76 = vector.extract_strided_slice %75 {offsets = [0, 0], sizes = [4, 256], strides = [1, 1]} : vector<5x256xf32> to vector<4x256xf32>
    %c32 = arith.constant 32 : index
    %c0_28 = arith.constant 0 : index
    %77 = vector.load %arg12[%c32, %c0_28] : memref<36x256xf32, #tpu.memory_space<vmem>>, vector<4x256xf32>
    tpu.vector_store %arg12[%c32, %c0_28], %76 {strides = array<i32>} : memref<36x256xf32, #tpu.memory_space<vmem>>, vector<4x256xf32>,
    %78 = vector.extract_strided_slice %75 {offsets = [4, 0], sizes = [1, 256], strides = [1, 1]} : vector<5x256xf32> to vector<1x256xf32>
    %c8_29 = arith.constant 8 : index
    %c0_30 = arith.constant 0 : index
    %79 = vector.load %arg13[%c8_29, %c0_30] : memref<9x256xf32, #tpu.memory_space<vmem>>, vector<1x256xf32>
    tpu.vector_store %arg13[%c8_29, %c0_30], %78 {strides = array<i32>} : memref<9x256xf32, #tpu.memory_space<vmem>>, vector<1x256xf32>,
    %c0_31 = arith.constant 0 : index
    %c0_32 = arith.constant 0 : index
    %80 = vector.load %arg5[%c0_31, %c0_32] : memref<4x36xbf16, #tpu.memory_space<vmem>>, vector<4x36xbf16>
    %c0_33 = arith.constant 0 : index
    %c0_34 = arith.constant 0 : index
    %81 = vector.load %arg12[%c0_33, %c0_34] : memref<36x256xf32, #tpu.memory_space<vmem>>, vector<36x256xf32>
    %82 = arith.truncf %81 : vector<36x256xf32> to vector<36x256xbf16>
    %cst_35 = arith.constant dense<0.000000e+00> : vector<4x256xf32>
    %83 = tpu.matmul %80, %82, %cst_35 {dimension_numbers = #tpu.dot_dimension_numbers<[1], [0], [0], [1], [0, 0, 1, 1], [], []>} : vector<4x36xbf16>, vector<36x256xbf16>, vector<4x256xf32> -> vector<4x256xf32>
    %c0_36 = arith.constant 0 : index
    %c0_37 = arith.constant 0 : index
    %84 = vector.load %arg6[%c0_36, %c0_37] : memref<4x1xf32, #tpu.memory_space<vmem>>, vector<4x1xf32>
    %85 = vector.broadcast %84 : vector<4x1xf32> to vector<4x256xf32>
    %86 = arith.addf %83, %85 : vector<4x256xf32>
    %cst_38 = arith.constant 0.000000e+00 : f32
    %87 = vector.broadcast %cst_38 : f32 to vector<4x256xf32>
    %88 = arith.maximumf %86, %87 : vector<4x256xf32>
    %c0_39 = arith.constant 0 : index
    %c0_40 = arith.constant 0 : index
    %89 = vector.load %arg7[%c0_39, %c0_40] : memref<1x9xbf16, #tpu.memory_space<vmem>>, vector<1x9xbf16>
    %c0_41 = arith.constant 0 : index
    %c0_42 = arith.constant 0 : index
    %90 = vector.load %arg13[%c0_41, %c0_42] : memref<9x256xf32, #tpu.memory_space<vmem>>, vector<9x256xf32>
    %91 = arith.truncf %90 : vector<9x256xf32> to vector<9x256xbf16>
    %cst_43 = arith.constant dense<0.000000e+00> : vector<1x256xf32>
    %92 = tpu.matmul %89, %91, %cst_43 {dimension_numbers = #tpu.dot_dimension_numbers<[1], [0], [0], [1], [0, 0, 1, 1], [], []>} : vector<1x9xbf16>, vector<9x256xbf16>, vector<1x256xf32> -> vector<1x256xf32>
    %c0_44 = arith.constant 0 : index
    %c0_45 = arith.constant 0 : index
    %93 = vector.load %arg8[%c0_44, %c0_45] : memref<1x1xf32, #tpu.memory_space<vmem>>, vector<1x1xf32>
    %94 = vector.broadcast %93 : vector<1x1xf32> to vector<1x256xf32>
    %95 = arith.addf %92, %94 : vector<1x256xf32>
    %cst_46 = arith.constant 0.000000e+00 : f32
    %96 = vector.broadcast %cst_46 : f32 to vector<1x256xf32>
    %97 = arith.maximumf %95, %96 : vector<1x256xf32>
    %98 = arith.extf %1 : vector<4x256xbf16> to vector<4x256xf32>
    %99 = vector.extract_strided_slice %2 {offsets = [1, 0], sizes = [1, 256], strides = [1, 1]} : vector<9x256xf32> to vector<1x256xf32>
    %cst_47 = arith.constant 5.000000e-01 : f32
    %100 = vector.broadcast %cst_47 : f32 to vector<1x256xf32>
    %101 = arith.cmpf ogt, %99, %100 : vector<1x256xf32>
    %c16_i32_48 = arith.constant 16 : i32
    %102 = tpu.dynamic_rotate %98 by %c16_i32_48 dim 1 : vector<4x256xf32>, i32 -> vector<4x256xf32>
    %cst_49 = arith.constant 0xFF800000 : f32
    %103 = vector.shape_cast %101 : vector<1x256xi1> to vector<1x256xi1>
    %104 = vector.broadcast %103 : vector<1x256xi1> to vector<4x256xi1>
    %105 = vector.broadcast %cst_49 : f32 to vector<4x256xf32>
    %106 = arith.select %104, %102, %105 : vector<4x256xi1>, vector<4x256xf32>
    %107 = vector.extract_strided_slice %2 {offsets = [7, 0], sizes = [1, 256], strides = [1, 1]} : vector<9x256xf32> to vector<1x256xf32>
    %cst_50 = arith.constant 5.000000e-01 : f32
    %108 = vector.broadcast %cst_50 : f32 to vector<1x256xf32>
    %109 = arith.cmpf ogt, %107, %108 : vector<1x256xf32>
    %c240_i32_51 = arith.constant 240 : i32
    %110 = tpu.dynamic_rotate %98 by %c240_i32_51 dim 1 : vector<4x256xf32>, i32 -> vector<4x256xf32>
    %cst_52 = arith.constant 0xFF800000 : f32
    %111 = vector.shape_cast %109 : vector<1x256xi1> to vector<1x256xi1>
    %112 = vector.broadcast %111 : vector<1x256xi1> to vector<4x256xi1>
    %113 = vector.broadcast %cst_52 : f32 to vector<4x256xf32>
    %114 = arith.select %112, %110, %113 : vector<4x256xi1>, vector<4x256xf32>
    %115 = arith.maximumf %106, %114 : vector<4x256xf32>
    %116 = arith.maximumf %98, %115 : vector<4x256xf32>
    %117 = vector.extract_strided_slice %2 {offsets = [3, 0], sizes = [1, 256], strides = [1, 1]} : vector<9x256xf32> to vector<1x256xf32>
    %cst_53 = arith.constant 5.000000e-01 : f32
    %118 = vector.broadcast %cst_53 : f32 to vector<1x256xf32>
    %119 = arith.cmpf ogt, %117, %118 : vector<1x256xf32>
    %c1_i32_54 = arith.constant 1 : i32
    %120 = tpu.dynamic_rotate %116 by %c1_i32_54 dim 1 : vector<4x256xf32>, i32 -> vector<4x256xf32>
    %cst_55 = arith.constant 0xFF800000 : f32
    %121 = vector.shape_cast %119 : vector<1x256xi1> to vector<1x256xi1>
    %122 = vector.broadcast %121 : vector<1x256xi1> to vector<4x256xi1>
    %123 = vector.broadcast %cst_55 : f32 to vector<4x256xf32>
    %124 = arith.select %122, %120, %123 : vector<4x256xi1>, vector<4x256xf32>
    %125 = vector.extract_strided_slice %2 {offsets = [5, 0], sizes = [1, 256], strides = [1, 1]} : vector<9x256xf32> to vector<1x256xf32>
    %cst_56 = arith.constant 5.000000e-01 : f32
    %126 = vector.broadcast %cst_56 : f32 to vector<1x256xf32>
    %127 = arith.cmpf ogt, %125, %126 : vector<1x256xf32>
    %c255_i32_57 = arith.constant 255 : i32
    %128 = tpu.dynamic_rotate %116 by %c255_i32_57 dim 1 : vector<4x256xf32>, i32 -> vector<4x256xf32>
    %cst_58 = arith.constant 0xFF800000 : f32
    %129 = vector.shape_cast %127 : vector<1x256xi1> to vector<1x256xi1>
    %130 = vector.broadcast %129 : vector<1x256xi1> to vector<4x256xi1>
    %131 = vector.broadcast %cst_58 : f32 to vector<4x256xf32>
    %132 = arith.select %130, %128, %131 : vector<4x256xi1>, vector<4x256xf32>
    %133 = arith.maximumf %124, %132 : vector<4x256xf32>
    %134 = arith.maximumf %116, %133 : vector<4x256xf32>
    %c0_59 = arith.constant 0 : index
    %c0_60 = arith.constant 0 : index
    %135 = vector.load %arg9[%c0_59, %c0_60] : memref<1x4xbf16, #tpu.memory_space<vmem>>, vector<1x4xbf16>
    %136 = arith.truncf %134 : vector<4x256xf32> to vector<4x256xbf16>
    %cst_61 = arith.constant dense<0.000000e+00> : vector<1x256xf32>
    %137 = tpu.matmul %135, %136, %cst_61 {dimension_numbers = #tpu.dot_dimension_numbers<[1], [0], [0], [1], [0, 0, 1, 1], [], []>} : vector<1x4xbf16>, vector<4x256xbf16>, vector<1x256xf32> -> vector<1x256xf32>
    %c0_62 = arith.constant 0 : index
    %c0_63 = arith.constant 0 : index
    %138 = vector.load %arg10[%c0_62, %c0_63] : memref<1x1xf32, #tpu.memory_space<vmem>>, vector<1x1xf32>
    %139 = vector.broadcast %138 : vector<1x1xf32> to vector<1x256xf32>
    %140 = arith.addf %137, %139 : vector<1x256xf32>
    %cst_64 = arith.constant 0.000000e+00 : f32
    %141 = vector.broadcast %cst_64 : f32 to vector<1x256xf32>
    %142 = arith.maximumf %140, %141 : vector<1x256xf32>
    %c0_65 = arith.constant 0 : index
    %c0_66 = arith.constant 0 : index
    %c0_67 = arith.constant 0 : index
    %143 = vector.load %arg11[%c0_65, %c0_66, %c0_67] : memref<1x8x256xf32, #tpu.memory_space<vmem>>, vector<1x2x256xf32>
    %144 = vector.shape_cast %143 : vector<1x2x256xf32> to vector<2x256xf32>
    %145 = vector.shape_cast %10 : vector<2x256xf32> to vector<1x2x256xf32>
    tpu.vector_store %arg11[%c0_65, %c0_66, %c0_67], %145 {strides = array<i32>} : memref<1x8x256xf32, #tpu.memory_space<vmem>>, vector<1x2x256xf32>,
    %c0_68 = arith.constant 0 : index
    %c2_69 = arith.constant 2 : index
    %c0_70 = arith.constant 0 : index
    %146 = vector.load %arg11[%c0_68, %c2_69, %c0_70] : memref<1x8x256xf32, #tpu.memory_space<vmem>>, vector<1x4x256xf32>
    %147 = vector.shape_cast %146 : vector<1x4x256xf32> to vector<4x256xf32>
    %148 = vector.shape_cast %88 : vector<4x256xf32> to vector<1x4x256xf32>
    tpu.vector_store %arg11[%c0_68, %c2_69, %c0_70], %148 {strides = array<i32>} : memref<1x8x256xf32, #tpu.memory_space<vmem>>, vector<1x4x256xf32>,
    %c0_71 = arith.constant 0 : index
    %c6_72 = arith.constant 6 : index
    %c0_73 = arith.constant 0 : index
    %149 = vector.load %arg11[%c0_71, %c6_72, %c0_73] : memref<1x8x256xf32, #tpu.memory_space<vmem>>, vector<1x1x256xf32>
    %150 = vector.shape_cast %149 : vector<1x1x256xf32> to vector<1x256xf32>
    %151 = vector.shape_cast %97 : vector<1x256xf32> to vector<1x1x256xf32>
    tpu.vector_store %arg11[%c0_71, %c6_72, %c0_73], %151 {strides = array<i32>} : memref<1x8x256xf32, #tpu.memory_space<vmem>>, vector<1x1x256xf32>,
    %c0_74 = arith.constant 0 : index
    %c7_75 = arith.constant 7 : index
    %c0_76 = arith.constant 0 : index
    %152 = vector.load %arg11[%c0_74, %c7_75, %c0_76] : memref<1x8x256xf32, #tpu.memory_space<vmem>>, vector<1x1x256xf32>
    %153 = vector.shape_cast %152 : vector<1x1x256xf32> to vector<1x256xf32>
    %154 = vector.shape_cast %142 : vector<1x256xf32> to vector<1x1x256xf32>
    tpu.vector_store %arg11[%c0_74, %c7_75, %c0_76], %154 {strides = array<i32>} : memref<1x8x256xf32, #tpu.memory_space<vmem>>, vector<1x1x256xf32>,
    return
  }
  func.func @transform_0(%arg0: i32) -> (i32, i32, i32) {
    %c0_i32 = arith.constant 0 : i32
    %c0_i32_0 = arith.constant 0 : i32
    %c0_i32_1 = arith.constant 0 : i32
    return %arg0, %c0_i32, %c0_i32_0 : i32, i32, i32
  }
  func.func @transform_1(%arg0: i32) -> (i32, i32) {
    %c0_i32 = arith.constant 0 : i32
    %c0_i32_0 = arith.constant 0 : i32
    %c0_i32_1 = arith.constant 0 : i32
    return %c0_i32, %c0_i32_0 : i32, i32
  }
  func.func @transform_2(%arg0: i32) -> (i32, i32) {
    %c0_i32 = arith.constant 0 : i32
    %c0_i32_0 = arith.constant 0 : i32
    %c0_i32_1 = arith.constant 0 : i32
    return %c0_i32, %c0_i32_0 : i32, i32
  }
  func.func @transform_3(%arg0: i32) -> (i32, i32) {
    %c0_i32 = arith.constant 0 : i32
    %c0_i32_0 = arith.constant 0 : i32
    %c0_i32_1 = arith.constant 0 : i32
    return %c0_i32, %c0_i32_0 : i32, i32
  }
  func.func @transform_4(%arg0: i32) -> (i32, i32) {
    %c0_i32 = arith.constant 0 : i32
    %c0_i32_0 = arith.constant 0 : i32
    %c0_i32_1 = arith.constant 0 : i32
    return %c0_i32, %c0_i32_0 : i32, i32
  }
  func.func @transform_5(%arg0: i32) -> (i32, i32) {
    %c0_i32 = arith.constant 0 : i32
    %c0_i32_0 = arith.constant 0 : i32
    %c0_i32_1 = arith.constant 0 : i32
    return %c0_i32, %c0_i32_0 : i32, i32
  }
  func.func @transform_6(%arg0: i32) -> (i32, i32) {
    %c0_i32 = arith.constant 0 : i32
    %c0_i32_0 = arith.constant 0 : i32
    %c0_i32_1 = arith.constant 0 : i32
    return %c0_i32, %c0_i32_0 : i32, i32
  }
  func.func @transform_7(%arg0: i32) -> (i32, i32) {
    %c0_i32 = arith.constant 0 : i32
    %c0_i32_0 = arith.constant 0 : i32
    %c0_i32_1 = arith.constant 0 : i32
    return %c0_i32, %c0_i32_0 : i32, i32
  }
  func.func @transform_8(%arg0: i32) -> (i32, i32) {
    %c0_i32 = arith.constant 0 : i32
    %c0_i32_0 = arith.constant 0 : i32
    %c0_i32_1 = arith.constant 0 : i32
    return %c0_i32, %c0_i32_0 : i32, i32
  }
  func.func @transform_9(%arg0: i32) -> (i32, i32) {
    %c0_i32 = arith.constant 0 : i32
    %c0_i32_0 = arith.constant 0 : i32
    %c0_i32_1 = arith.constant 0 : i32
    return %c0_i32, %c0_i32_0 : i32, i32
  }
  func.func @transform_10(%arg0: i32) -> (i32, i32, i32) {
    %c0_i32 = arith.constant 0 : i32
    %c0_i32_0 = arith.constant 0 : i32
    %c0_i32_1 = arith.constant 0 : i32
    return %arg0, %c0_i32, %c0_i32_0 : i32, i32, i32
  }
}

</mosaic_0001>

<llo_original>
// kernel: tpu_custom_call.1
$region0: #{tpu_custom_call.1}
  #allocation0 [shape = 'u32[]', space=smem, size = 0x4, offset = 0x4, fixed_abs, tag = 'smem constant byte address 0x4 - core index']
  #allocation1 [shape = 'u32[144,128]{1,0:T(1,128)}', space=vmem, size = 0x12000, scoped, tag = 'internal scratch']
  #allocation2 [shape = 'f32[36,256]{1,0:T(8,128)}', space=vmem, size = 0xa000, scoped, tag = 'scratch operand']
  #allocation3 [shape = 'f32[9,256]{1,0:T(8,128)}', space=vmem, size = 0x4000, scoped, tag = 'scratch operand']
  #allocation4 [shape = 'f32[1,1]{1,0:T(1,128)S(1)}', space=vmem, size = 0x200, scoped, tag = 'scoped memory for tpu_custom_call.1']
  #allocation5 [shape = 'f32[1,1]{1,0:T(1,128)S(1)}', space=vmem, size = 0x200, scoped, tag = 'scoped memory for tpu_custom_call.1']
  %s0 = inlined_call_operand.vmem [shape: bf16[2,4,256], index: 0, kind: input, shape index: {}]
  %s1 = inlined_call_operand.hbm [shape: f32[9,256], index: 1, kind: input, shape index: {}]
  %s2 = inlined_call_operand.vmem [shape: bf16[7,4], index: 2, kind: input, shape index: {}]
  %s3 = inlined_call_operand.vmem [shape: f32[7,1], index: 3, kind: input, shape index: {}]
  %s4 = inlined_call_operand.vmem [shape: bf16[4,36], index: 4, kind: input, shape index: {}]
  %s5 = inlined_call_operand.vmem [shape: f32[4,1], index: 5, kind: input, shape index: {}]
  %s6 = inlined_call_operand.vmem [shape: bf16[1,9], index: 6, kind: input, shape index: {}]
  %s7 = inlined_call_operand.<no memory space> [shape: f32[1,1], index: 7, kind: input, shape index: {}]
  %s8 = inlined_call_operand.vmem [shape: bf16[1,4], index: 8, kind: input, shape index: {}]
  %s9 = inlined_call_operand.<no memory space> [shape: f32[1,1], index: 9, kind: input, shape index: {}]
  %s10 = inlined_call_operand.hbm [shape: f32[2,8,256], index: 10, kind: output, shape index: {}]
  %s11 = sld [smem:[#allocation0]]
  $region77: #{tpu_custom_call.1} parent=0
    _
  %s13 = ssub.s32 1, %s11
  %s14 = scalar_select 0, %s13, %s11
  %v15 = vstv %s7
  %16 = vst [vmem:[#allocation4] sm:$0x1] %v15
  %v17 = vstv %s9
  %18 = vst [vmem:[#allocation5] sm:$0x1] %v17
  $region1: #{tpu_custom_call.1} parent=0
    #allocation6 [shape = 'u8[16384]{0}', space=vmem, size = 0x4000, scoped, tag = 'input window, operand 1, single buffered']
    #allocation7 [shape = 's32[2]{0}', space=sflag, size = 0x8, scoped, tag = 'scoped memory for tpu_custom_call.1']
    #allocation8 [shape = 's32[2]{0}', space=sflag, size = 0x8, scoped, tag = 'scoped memory for tpu_custom_call.1']
    #allocation9 [shape = 'u8[16384]{0}', space=vmem, size = 0x4000, scoped, tag = 'output window, operand 0']
    %19 = vsyncpa [#allocation7], 0
    %20 = vsyncpa [#allocation8], 0
    %s21 = scalar_lea.sflag [#allocation8], 1
    %22 = vsyncpa %s21, 0
    loop: start=0, step=1, limit=4
    $region2: #{tpu_custom_call.1} parent=1 // loop_pre_header
      _
    $region3: #{tpu_custom_call.1} parent=1 // loop_header
      %s24 = sphi 0, %s28
      %p25 = scmp.ge.s32.totalorder %s24, 4
      %s34 = sphi 0, %s36
      %s37 = sphi 0, %s34
      %s38 = sphi 0, %s37
      %s54 = sphi 0, %s38
      %s58 = sphi 0, %s58
      %s60 = sphi 0, %s58
      %s61 = sphi 0, %s60
      %s75 = sphi 0, %s61
      %s79 = sphi 0, %s79
      %s81 = sphi 0, %s79
      %s82 = sphi 0, %s81
      %s96 = sphi 0, %s82
      %s100 = sphi 0, %s100
      %s102 = sphi 0, %s100
      %s103 = sphi 0, %s102
      %s117 = sphi 0, %s103
      %s121 = sphi 0, %s121
      %s123 = sphi 0, %s121
      %s124 = sphi 0, %s123
      %s138 = sphi 0, %s124
      %s142 = sphi 0, %s142
      %s144 = sphi 0, %s142
      %s145 = sphi 0, %s144
      %s159 = sphi 0, %s145
      %s163 = sphi 0, %s163
      %s165 = sphi 0, %s163
      %s166 = sphi 0, %s165
      %s180 = sphi 0, %s166
      %s184 = sphi 0, %s184
      %s186 = sphi 0, %s184
      %s187 = sphi 0, %s186
      %s201 = sphi 0, %s187
      %s205 = sphi 0, %s205
      %s207 = sphi 0, %s205
      %s208 = sphi 0, %s207
      %s222 = sphi 0, %s208
      %s226 = sphi 0, %s226
      %s228 = sphi 0, %s226
      %s229 = sphi 0, %s228
      %s243 = sphi 0, %s229
      %s249 = sphi 0, %s251
      %s252 = sphi 0, %s249
      %s253 = sphi 0, %s252
      %s269 = sphi 0, %s253
    $region4: #{tpu_custom_call.1} parent=1 // loop_header_branch
      %27 = sbr.rel (%p25) target = $region8
    $region5: #{tpu_custom_call.1} parent=1 // loop_body
      %s29 = ssub.s32 %s24, 1
      %s30 = ssub.s32 %s24, 2
      %s31 = sadd.s32 %s24, 1
      %s32 = ssub.s32 %s24, %s31
      %p33 = scmp.eq.s32.totalorder %s32, 0
      %s35 = sadd.s32 %s34, 1
      %s36 = scalar_select %p33, %s34, %s35
      %p39 = pneg %p33
      %p40 = scmp.eq.s32.totalorder %s24, 1
      %p41 = por %p39, %p40
      %p42 = scmp.ne.s32.totalorder %s34, %s37
      %p43 = scmp.eq.s32.totalorder %s24, 0
      %p44 = por %p42, %p43
      %p45 = scmp.ne.s32.totalorder %s34, %s37
      %p46 = scmp.eq.s32.totalorder %s29, 1
      %p47 = por %p45, %p46
      %p48 = scmp.ne.s32.totalorder %s37, %s38
      %p49 = scmp.eq.s32.totalorder %s29, 0
      %p50 = por %p48, %p49
      %p51 = scmp.ne.s32.totalorder %s37, %s38
      %p52 = scmp.eq.s32.totalorder %s30, 1
      %p53 = por %p51, %p52
      %p55 = scmp.ne.s32.totalorder %s38, %s54
      %p56 = scmp.eq.s32.totalorder %s30, 0
      %p57 = por %p55, %p56
      %s59 = sadd.s32 %s58, 1
      %p62 = scmp.eq.s32.totalorder %s24, 1
      %p63 = scmp.ne.s32.totalorder %s58, %s60
      %p64 = scmp.eq.s32.totalorder %s24, 0
      %p65 = por %p63, %p64
      %p66 = scmp.ne.s32.totalorder %s58, %s60
      %p67 = scmp.eq.s32.totalorder %s29, 1
      %p68 = por %p66, %p67
      %p69 = scmp.ne.s32.totalorder %s60, %s61
      %p70 = scmp.eq.s32.totalorder %s29, 0
      %p71 = por %p69, %p70
      %p72 = scmp.ne.s32.totalorder %s60, %s61
      %p73 = scmp.eq.s32.totalorder %s30, 1
      %p74 = por %p72, %p73
      %p76 = scmp.ne.s32.totalorder %s61, %s75
      %p77 = scmp.eq.s32.totalorder %s30, 0
      %p78 = por %p76, %p77
      %s80 = sadd.s32 %s79, 1
      %p83 = scmp.eq.s32.totalorder %s24, 1
      %p84 = scmp.ne.s32.totalorder %s79, %s81
      %p85 = scmp.eq.s32.totalorder %s24, 0
      %p86 = por %p84, %p85
      %p87 = scmp.ne.s32.totalorder %s79, %s81
      %p88 = scmp.eq.s32.totalorder %s29, 1
      %p89 = por %p87, %p88
      %p90 = scmp.ne.s32.totalorder %s81, %s82
      %p91 = scmp.eq.s32.totalorder %s29, 0
      %p92 = por %p90, %p91
      %p93 = scmp.ne.s32.totalorder %s81, %s82
      %p94 = scmp.eq.s32.totalorder %s30, 1
      %p95 = por %p93, %p94
      %p97 = scmp.ne.s32.totalorder %s82, %s96
      %p98 = scmp.eq.s32.totalorder %s30, 0
      %p99 = por %p97, %p98
      %s101 = sadd.s32 %s100, 1
      %p104 = scmp.eq.s32.totalorder %s24, 1
      %p105 = scmp.ne.s32.totalorder %s100, %s102
      %p106 = scmp.eq.s32.totalorder %s24, 0
      %p107 = por %p105, %p106
      %p108 = scmp.ne.s32.totalorder %s100, %s102
      %p109 = scmp.eq.s32.totalorder %s29, 1
      %p110 = por %p108, %p109
      %p111 = scmp.ne.s32.totalorder %s102, %s103
      %p112 = scmp.eq.s32.totalorder %s29, 0
      %p113 = por %p111, %p112
      %p114 = scmp.ne.s32.totalorder %s102, %s103
      %p115 = scmp.eq.s32.totalorder %s30, 1
      %p116 = por %p114, %p115
      %p118 = scmp.ne.s32.totalorder %s103, %s117
      %p119 = scmp.eq.s32.totalorder %s30, 0
      %p120 = por %p118, %p119
      %s122 = sadd.s32 %s121, 1
      %p125 = scmp.eq.s32.totalorder %s24, 1
      %p126 = scmp.ne.s32.totalorder %s121, %s123
      %p127 = scmp.eq.s32.totalorder %s24, 0
      %p128 = por %p126, %p127
      %p129 = scmp.ne.s32.totalorder %s121, %s123
      %p130 = scmp.eq.s32.totalorder %s29, 1
      %p131 = por %p129, %p130
      %p132 = scmp.ne.s32.totalorder %s123, %s124
      %p133 = scmp.eq.s32.totalorder %s29, 0
      %p134 = por %p132, %p133
      %p135 = scmp.ne.s32.totalorder %s123, %s124
      %p136 = scmp.eq.s32.totalorder %s30, 1
      %p137 = por %p135, %p136
      %p139 = scmp.ne.s32.totalorder %s124, %s138
      %p140 = scmp.eq.s32.totalorder %s30, 0
      %p141 = por %p139, %p140
      %s143 = sadd.s32 %s142, 1
      %p146 = scmp.eq.s32.totalorder %s24, 1
      %p147 = scmp.ne.s32.totalorder %s142, %s144
      %p148 = scmp.eq.s32.totalorder %s24, 0
      %p149 = por %p147, %p148
      %p150 = scmp.ne.s32.totalorder %s142, %s144
      %p151 = scmp.eq.s32.totalorder %s29, 1
      %p152 = por %p150, %p151
      %p153 = scmp.ne.s32.totalorder %s144, %s145
      %p154 = scmp.eq.s32.totalorder %s29, 0
      %p155 = por %p153, %p154
      %p156 = scmp.ne.s32.totalorder %s144, %s145
      %p157 = scmp.eq.s32.totalorder %s30, 1
      %p158 = por %p156, %p157
      %p160 = scmp.ne.s32.totalorder %s145, %s159
      %p161 = scmp.eq.s32.totalorder %s30, 0
      %p162 = por %p160, %p161
      %s164 = sadd.s32 %s163, 1
      %p167 = scmp.eq.s32.totalorder %s24, 1
      %p168 = scmp.ne.s32.totalorder %s163, %s165
      %p169 = scmp.eq.s32.totalorder %s24, 0
      %p170 = por %p168, %p169
      %p171 = scmp.ne.s32.totalorder %s163, %s165
      %p172 = scmp.eq.s32.totalorder %s29, 1
      %p173 = por %p171, %p172
      %p174 = scmp.ne.s32.totalorder %s165, %s166
      %p175 = scmp.eq.s32.totalorder %s29, 0
      %p176 = por %p174, %p175
      %p177 = scmp.ne.s32.totalorder %s165, %s166
      %p178 = scmp.eq.s32.totalorder %s30, 1
      %p179 = por %p177, %p178
      %p181 = scmp.ne.s32.totalorder %s166, %s180
      %p182 = scmp.eq.s32.totalorder %s30, 0
      %p183 = por %p181, %p182
      %s185 = sadd.s32 %s184, 1
      %p188 = scmp.eq.s32.totalorder %s24, 1
      %p189 = scmp.ne.s32.totalorder %s184, %s186
      %p190 = scmp.eq.s32.totalorder %s24, 0
      %p191 = por %p189, %p190
      %p192 = scmp.ne.s32.totalorder %s184, %s186
      %p193 = scmp.eq.s32.totalorder %s29, 1
      %p194 = por %p192, %p193
      %p195 = scmp.ne.s32.totalorder %s186, %s187
      %p196 = scmp.eq.s32.totalorder %s29, 0
      %p197 = por %p195, %p196
      %p198 = scmp.ne.s32.totalorder %s186, %s187
      %p199 = scmp.eq.s32.totalorder %s30, 1
      %p200 = por %p198, %p199
      %p202 = scmp.ne.s32.totalorder %s187, %s201
      %p203 = scmp.eq.s32.totalorder %s30, 0
      %p204 = por %p202, %p203
      %s206 = sadd.s32 %s205, 1
      %p209 = scmp.eq.s32.totalorder %s24, 1
      %p210 = scmp.ne.s32.totalorder %s205, %s207
      %p211 = scmp.eq.s32.totalorder %s24, 0
      %p212 = por %p210, %p211
      %p213 = scmp.ne.s32.totalorder %s205, %s207
      %p214 = scmp.eq.s32.totalorder %s29, 1
      %p215 = por %p213, %p214
      %p216 = scmp.ne.s32.totalorder %s207, %s208
      %p217 = scmp.eq.s32.totalorder %s29, 0
      %p218 = por %p216, %p217
      %p219 = scmp.ne.s32.totalorder %s207, %s208
      %p220 = scmp.eq.s32.totalorder %s30, 1
      %p221 = por %p219, %p220
      %p223 = scmp.ne.s32.totalorder %s208, %s222
      %p224 = scmp.eq.s32.totalorder %s30, 0
      %p225 = por %p223, %p224
      %s227 = sadd.s32 %s226, 1
      %p230 = scmp.eq.s32.totalorder %s24, 1
      %p231 = scmp.ne.s32.totalorder %s226, %s228
      %p232 = scmp.eq.s32.totalorder %s24, 0
      %p233 = por %p231, %p232
      %p234 = scmp.ne.s32.totalorder %s226, %s228
      %p235 = scmp.eq.s32.totalorder %s29, 1
      %p236 = por %p234, %p235
      %p237 = scmp.ne.s32.totalorder %s228, %s229
      %p238 = scmp.eq.s32.totalorder %s29, 0
      %p239 = por %p237, %p238
      %p240 = scmp.ne.s32.totalorder %s228, %s229
      %p241 = scmp.eq.s32.totalorder %s30, 1
      %p242 = por %p240, %p241
      %p244 = scmp.ne.s32.totalorder %s229, %s243
      %p245 = scmp.eq.s32.totalorder %s30, 0
      %p246 = por %p244, %p245
      %s247 = ssub.s32 %s24, %s31
      %p248 = scmp.eq.s32.totalorder %s247, 0
      %s250 = sadd.s32 %s249, 1
      %s251 = scalar_select %p248, %s249, %s250
      %p254 = pneg %p248
      %p255 = scmp.eq.s32.totalorder %s24, 1
      %p256 = por %p254, %p255
      %p257 = scmp.ne.s32.totalorder %s249, %s252
      %p258 = scmp.eq.s32.totalorder %s24, 0
      %p259 = por %p257, %p258
      %p260 = scmp.ne.s32.totalorder %s249, %s252
      %p261 = scmp.eq.s32.totalorder %s29, 1
      %p262 = por %p260, %p261
      %p263 = scmp.ne.s32.totalorder %s252, %s253
      %p264 = scmp.eq.s32.totalorder %s29, 0
      %p265 = por %p263, %p264
      %p266 = scmp.ne.s32.totalorder %s252, %s253
      %p267 = scmp.eq.s32.totalorder %s30, 1
      %p268 = por %p266, %p267
      %p270 = scmp.ne.s32.totalorder %s253, %s269
      %p271 = scmp.eq.s32.totalorder %s30, 0
      %p272 = por %p270, %p271
      %p273 = scmp.le.s32.totalorder 1, %s24
      %p274 = scmp.lt.s32.totalorder %s24, 3
      %p275 = pnand %p273, %p274
      %p276 = pneg %p275
      // Predicated region
      $region9: #{tpu_custom_call.1} parent=5 // pred_check
        _
      $region10: #{tpu_custom_call.1} parent=5 // pred_check_branch
        %278 = sbr.rel (%p275) target = $region12
      $region11: #{tpu_custom_call.1} parent=5 // pred_region
        %s279 = ssub.s32 %s24, 1
        // Predicated region
        $region13: #{tpu_custom_call.1} parent=11 // pred_check
          %p280 = pneg %p71
        $region14: #{tpu_custom_call.1} parent=11 // pred_check_branch
          %282 = sbr.rel (%p280) target = $region16
        $region15: #{tpu_custom_call.1} parent=11 // pred_region
          %s284 = ssub.s32 512, 512
          %285 = vsyncadd [#allocation7], %s284
          %s286 = sshll.u32 [#allocation6], 4
          %s287 = int_to_ptr.vmem [resolvable:$true] %s286
          %292 = dma.hbm_to_vmem [thread:$0]  %s1, 512, %s287, [#allocation7], 256, 256, 16
        $region16: #{tpu_custom_call.1} parent=11 // pred_fallthru
          _
        // Predicated region
        $region17: #{tpu_custom_call.1} parent=11 // pred_check
          %p293 = pneg %p92
        $region18: #{tpu_custom_call.1} parent=11 // pred_check_branch
          %295 = sbr.rel (%p293) target = $region20
        $region19: #{tpu_custom_call.1} parent=11 // pred_region
          _
        $region20: #{tpu_custom_call.1} parent=11 // pred_fallthru
          _
        // Predicated region
        $region21: #{tpu_custom_call.1} parent=11 // pred_check
          %p296 = pneg %p113
        $region22: #{tpu_custom_call.1} parent=11 // pred_check_branch
          %298 = sbr.rel (%p296) target = $region24
        $region23: #{tpu_custom_call.1} parent=11 // pred_region
          _
        $region24: #{tpu_custom_call.1} parent=11 // pred_fallthru
          _
        // Predicated region
        $region25: #{tpu_custom_call.1} parent=11 // pred_check
          %p299 = pneg %p134
        $region26: #{tpu_custom_call.1} parent=11 // pred_check_branch
          %301 = sbr.rel (%p299) target = $region28
        $region27: #{tpu_custom_call.1} parent=11 // pred_region
          _
        $region28: #{tpu_custom_call.1} parent=11 // pred_fallthru
          _
        // Predicated region
        $region29: #{tpu_custom_call.1} parent=11 // pred_check
          %p302 = pneg %p155
        $region30: #{tpu_custom_call.1} parent=11 // pred_check_branch
          %304 = sbr.rel (%p302) target = $region32
        $region31: #{tpu_custom_call.1} parent=11 // pred_region
          _
        $region32: #{tpu_custom_call.1} parent=11 // pred_fallthru
          _
        // Predicated region
        $region33: #{tpu_custom_call.1} parent=11 // pred_check
          %p305 = pneg %p176
        $region34: #{tpu_custom_call.1} parent=11 // pred_check_branch
          %307 = sbr.rel (%p305) target = $region36
        $region35: #{tpu_custom_call.1} parent=11 // pred_region
          _
        $region36: #{tpu_custom_call.1} parent=11 // pred_fallthru
          _
        // Predicated region
        $region37: #{tpu_custom_call.1} parent=11 // pred_check
          %p308 = pneg %p197
        $region38: #{tpu_custom_call.1} parent=11 // pred_check_branch
          %310 = sbr.rel (%p308) target = $region40
        $region39: #{tpu_custom_call.1} parent=11 // pred_region
          _
        $region40: #{tpu_custom_call.1} parent=11 // pred_fallthru
          _
        // Predicated region
        $region41: #{tpu_custom_call.1} parent=11 // pred_check
          %p311 = pneg %p218
        $region42: #{tpu_custom_call.1} parent=11 // pred_check_branch
          %313 = sbr.rel (%p311) target = $region44
        $region43: #{tpu_custom_call.1} parent=11 // pred_region
          _
        $region44: #{tpu_custom_call.1} parent=11 // pred_fallthru
          _
        // Predicated region
        $region45: #{tpu_custom_call.1} parent=11 // pred_check
          %p314 = pneg %p239
        $region46: #{tpu_custom_call.1} parent=11 // pred_check_branch
          %316 = sbr.rel (%p314) target = $region48
        $region47: #{tpu_custom_call.1} parent=11 // pred_region
          _
        $region48: #{tpu_custom_call.1} parent=11 // pred_fallthru
          _
      $region12: #{tpu_custom_call.1} parent=5 // pred_fallthru
        _
      %p317 = scmp.lt.s32.totalorder %s24, 2
      // Predicated region
      $region49: #{tpu_custom_call.1} parent=5 // pred_check
        %p318 = pneg %p317
      $region50: #{tpu_custom_call.1} parent=5 // pred_check_branch
        %320 = sbr.rel (%p318) target = $region52
      $region51: #{tpu_custom_call.1} parent=5 // pred_region
        // Predicated region
        $region53: #{tpu_custom_call.1} parent=51 // pred_check
          %p321 = pneg %p44
        $region54: #{tpu_custom_call.1} parent=51 // pred_check_branch
          %323 = sbr.rel (%p321) target = $region56
        $region55: #{tpu_custom_call.1} parent=51 // pred_region
          %p324 = scmp.lt.s32.totalorder %s24, 1
          %s325 = scalar_select %p324, %s24, 1
          %s326 = smul.addr %s325, 2
          %s327 = smul.addr %s326, 2
          %s328 = scalar_lea.vmem %s0, %s327
        $region56: #{tpu_custom_call.1} parent=51 // pred_fallthru
          _
      $region52: #{tpu_custom_call.1} parent=5 // pred_fallthru
        _
      %p329 = scmp.le.s32.totalorder 1, %s24
      %p330 = scmp.lt.s32.totalorder %s24, 3
      %p331 = pnand %p329, %p330
      %p332 = pneg %p331
      // Predicated region
      $region57: #{tpu_custom_call.1} parent=5 // pred_check
        _
      $region58: #{tpu_custom_call.1} parent=5 // pred_check_branch
        %334 = sbr.rel (%p331) target = $region60
      $region59: #{tpu_custom_call.1} parent=5 // pred_region
        %s335 = ssub.s32 %s24, 1
        // Predicated region
        $region61: #{tpu_custom_call.1} parent=59 // pred_check
          %p336 = pneg %p71
        $region62: #{tpu_custom_call.1} parent=59 // pred_check_branch
          %338 = sbr.rel (%p336) target = $region64
        $region63: #{tpu_custom_call.1} parent=59 // pred_region
          %339 = dma.done [#allocation7], 512
        $region64: #{tpu_custom_call.1} parent=59 // pred_fallthru
          _
        %p340 = scmp.lt.s32.totalorder %s29, 1
        %s341 = scalar_select %p340, %s29, 1
        %s342 = smul.addr %s341, 2
        %s343 = smul.addr %s342, 2
        %s344 = scalar_lea.vmem %s0, %s343
        %p345 = pneg %p50
        %p346 = pneg %p47
        %p347 = pneg %p71
        %p348 = pneg %p68
        %p349 = pneg %p92
        %p350 = pneg %p89
        %p351 = pneg %p113
        %p352 = pneg %p110
        %p353 = pneg %p134
        %p354 = pneg %p131
        %p355 = pneg %p155
        %p356 = pneg %p152
        %p357 = pneg %p176
        %p358 = pneg %p173
        %p359 = pneg %p197
        %p360 = pneg %p194
        %p361 = pneg %p218
        %p362 = pneg %p215
        %p363 = pneg %p239
        %p364 = pneg %p236
        %p365 = pneg %p265
        %p366 = pneg %p262
        %s367 = sand.u32 %s252, 1
        %s368 = scalar_lea.sflag [#allocation8], %s367
        %s369 = sand.u32 %s252, 1
        %s370 = smul.addr %s369, 16
        %s371 = scalar_lea.vmem [#allocation9], %s370
        %p372 = scmp.lt.s32.totalorder %s29, 1
        %s373 = scalar_select %p372, %s29, 1
        %s374 = smul.addr %s373, 2
        %s375 = smul.addr %s374, 2
        %s376 = scalar_lea.vmem %s0, %s375
        %v378 = vld [vmem:[%s376] sm:$0xf]
        %v379 = vld [vmem:[#allocation6] sm:$0xff]
        %v380 = vld [vmem:[#allocation6 + $0x8] sm:$0xff]
        %v381 = vld [vmem:[#allocation6 + $0x10] sm:$0x1]
        %v382 = vld [vmem:[#allocation6 + $0x18] sm:$0x1]
        %v383 = vld [vmem:[%s2] sm:$0xf]
        %v384 = vld [vmem:[%s3] sm:$0x7f]
        %386 = vset.pattern.permute.xlu0 0
        %387 = vperm.xlu0 %386, %v384
        %v388 = vpop.permute.xlu0 %387
        %v392 = vunpack.c.l.s4 1983009808
        %v393 = vunpack.c.0.s8 %v392
        %v394 = vlaneseq
        %v395 = vshrl.u32 %v394, 7
        %v396 = vsub.s32 %v393, %v395
        %v397 = vrot.slane %v378, %v396
        %v398 = vcombine.high %v397, %v397
        %vm399 = vcmask 31744
        %v401 = vsel %vm399, %v383, 0
        %vm403 = vcmask 1041408
        %v405 = vsel %vm403, %v397, 0
        %v408 = vsel %vm403, %v398, 0
        %410 = vmatprep.subr.bf16.mxu0 %v408
        %411 = vmatpush1.bf16.msra.mxu0 %v405
        %412 = vmatprep.subr.bf16.mxu0 0
        %413 = vmatpush1.bf16.msra.mxu0 0
        %414 = vmatprep.subr.bf16.mxu0 0
        %415 = vmatpush1.bf16.msra.mxu0 0
        %416 = vmatprep.subr.bf16.mxu0 0
        %417 = vmatpush1.bf16.msra.mxu0 0
        %418 = vmatprep.subr.bf16.mxu0 0
        %419 = vmatpush1.bf16.msra.mxu0 0
        %420 = vmatprep.subr.bf16.mxu0 0
        %421 = vmatpush1.bf16.msra.mxu0 0
        %422 = vmatprep.subr.bf16.mxu0 0
        %423 = vmatpush1.bf16.msra.mxu0 0
        %424 = vmatprep.subr.bf16.mxu0 0
        %425 = vmatpush1.bf16.msra.mxu0 0
        %426 = vmatprep.subr.bf16.mxu0 0
        %427 = vmatpush1.bf16.msra.mxu0 0
        %428 = vmatprep.subr.bf16.mxu0 0
        %429 = vmatpush1.bf16.msra.mxu0 0
        %430 = vmatprep.subr.bf16.mxu0 0
        %431 = vmatpush1.bf16.msra.mxu0 0
        %432 = vmatprep.subr.bf16.mxu0 0
        %433 = vmatpush1.bf16.msra.mxu0 0
        %434 = vmatprep.subr.bf16.mxu0 0
        %435 = vmatpush1.bf16.msra.mxu0 0
        %436 = vmatprep.subr.bf16.mxu0 0
        %437 = vmatpush1.bf16.msra.mxu0 0
        %438 = vmatprep.subr.bf16.mxu0 0
        %439 = vmatpush1.bf16.msra.mxu0 0
        %440 = vmatprep.subr.bf16.mxu0 0
        %441 = vmatpush1.bf16.msra.mxu0 0
        %442 = vmatprep.mubr.bf16.mxu0 0
        %443 = vmatmul.mubr.bf16.gmra.mrb[0].mxu0 %v401
        %v444 = vpop.f32.mrb[0].mxu0
        %v445 = vadd.f32 %v388, %v444
        %v446 = vpop.f32.mrb[0].mxu0
        %v447 = vadd.f32 %v388, %v446
        %v448 = vpop.f32.mrb[0].mxu0
        %v449 = vpop.f32.mrb[0].mxu0
        %450 = vdwg.mxu0
        %v451 = vmax.f32 %v445, 0.0
        %v452 = vmax.f32 %v447, 0.0
        %v455 = vrot.slane %v451, 2
        %v456 = vrot.slane %v452, 2
        %459 = vrot.lane.b32.xlu0 %v455, 17
        %v460 = vpop.permute.xlu0 %459
        %461 = vrot.lane.b32.xlu0 %v456, 17
        %v462 = vpop.permute.xlu0 %461
        %v463 = vlaneseq
        %v464 = vand.u32 %v463, 127
        %vm465 = vcmp.lt.s32.totalorder %v464, 17
        %v466 = vsel %vm465, %v460, %v462
        %v467 = vsel %vm465, %v462, %v460
        %v468 = vlaneseq
        %v469 = vshrl.u32 %v468, 7
        %v470 = vsub.s32 0, %v469
        %v471 = vrot.slane %v379, %v470
        %v472 = vlaneseq
        %v473 = vshrl.u32 %v472, 7
        %v474 = vsub.s32 0, %v473
        %v475 = vrot.slane %v380, %v474
        %v476 = vmul.f32 %v467, %v471
        %v477 = vmul.f32 %v466, %v475
        %478 = vst [vmem:[#allocation2] sm:$0xf] %v476
        %479 = vst [vmem:[#allocation2 + $0x8] sm:$0xf] %v477
        %v482 = vcombine.high %v476, %v477
        %v484 = vunpack.c.l.s4 1966171168
        %v485 = vunpack.c.0.s8 %v484
        %v486 = vlaneseq
        %v487 = vshrl.u32 %v486, 7
        %v488 = vsub.s32 %v485, %v487
        %v489 = vrot.slane %v482, %v488
        %v491 = vunpack.c.l.s4 1966171168
        %v492 = vunpack.c.0.s8 %v491
        %v493 = vlaneseq
        %v494 = vshrl.u32 %v493, 7
        %v495 = vsub.s32 %v492, %v494
        %v496 = vrot.slane %v489, %v495
        %v498 = vlaneseq
        %vm499 = vcmp.ge.s32.totalorder %v498, 0
        %vm500 = vcmp.lt.s32.totalorder %v498, 256
        %vm501 = vmand %vm499, %vm500
        %502 = vst.msk [vmem:[#allocation3] ss:$8 sm:$0x3] %vm501, %v496
        %503 = vst.msk [vmem:[#allocation3] ss:$8 sm:$0x0] %vm501, %v496
        %504 = vrot.lane.b32.xlu0 %v455, 16
        %v505 = vpop.permute.xlu0 %504
        %506 = vrot.lane.b32.xlu0 %v456, 16
        %v507 = vpop.permute.xlu0 %506
        %vm508 = vcmp.lt.s32.totalorder %v464, 16
        %v509 = vsel %vm508, %v505, %v507
        %v510 = vsel %vm508, %v507, %v505
        %v511 = vlaneseq
        %v512 = vshrl.u32 %v511, 7
        %v513 = vsub.s32 1, %v512
        %v514 = vrot.slane %v379, %v513
        %v515 = vlaneseq
        %v516 = vshrl.u32 %v515, 7
        %v517 = vsub.s32 1, %v516
        %v518 = vrot.slane %v380, %v517
        %v519 = vmul.f32 %v510, %v514
        %v520 = vmul.f32 %v509, %v518
        %v523 = vrot.slane %v519, 4
        %v524 = vrot.slane %v520, 4
        %527 = vst [vmem:[#allocation2] sm:$0xf0] %v523
        %528 = vst [vmem:[#allocation2 + $0x8] sm:$0xf0] %v524
        %v529 = vcombine.high %v519, %v520
        %v531 = vunpack.c.l.s4 1966171168
        %v532 = vunpack.c.0.s8 %v531
        %v533 = vlaneseq
        %v534 = vshrl.u32 %v533, 7
        %v535 = vsub.s32 %v532, %v534
        %v536 = vrot.slane %v529, %v535
        %v538 = vunpack.c.l.s4 1966171168
        %v539 = vunpack.c.0.s8 %v538
        %v540 = vlaneseq
        %v541 = vshrl.u32 %v540, 7
        %v542 = vsub.s32 %v539, %v541
        %v543 = vrot.slane %v536, %v542
        %s545 = scalar_lea.vmem [#allocation3], 1
        %546 = vst.msk [vmem:[%s545] ss:$8 sm:$0x3] %vm501, %v543
        %547 = vst.msk [vmem:[%s545] ss:$8 sm:$0x0] %vm501, %v543
        %548 = vrot.lane.b32.xlu0 %v455, 15
        %v549 = vpop.permute.xlu0 %548
        %550 = vrot.lane.b32.xlu0 %v456, 15
        %v551 = vpop.permute.xlu0 %550
        %vm552 = vcmp.lt.s32.totalorder %v464, 15
        %v553 = vsel %vm552, %v549, %v551
        %v554 = vsel %vm552, %v551, %v549
        %v555 = vlaneseq
        %v556 = vshrl.u32 %v555, 7
        %v557 = vsub.s32 2, %v556
        %v558 = vrot.slane %v379, %v557
        %v559 = vlaneseq
        %v560 = vshrl.u32 %v559, 7
        %v561 = vsub.s32 2, %v560
        %v562 = vrot.slane %v380, %v561
        %v563 = vmul.f32 %v554, %v558
        %v564 = vmul.f32 %v553, %v562
        %565 = vst [vmem:[#allocation2 + $0x10] sm:$0xf] %v563
        %566 = vst [vmem:[#allocation2 + $0x18] sm:$0xf] %v564
        %v569 = vcombine.high %v563, %v564
        %v571 = vunpack.c.l.s4 1966171168
        %v572 = vunpack.c.0.s8 %v571
        %v573 = vlaneseq
        %v574 = vshrl.u32 %v573, 7
        %v575 = vsub.s32 %v572, %v574
        %v576 = vrot.slane %v569, %v575
        %v578 = vunpack.c.l.s4 1966171168
        %v579 = vunpack.c.0.s8 %v578
        %v580 = vlaneseq
        %v581 = vshrl.u32 %v580, 7
        %v582 = vsub.s32 %v579, %v581
        %v583 = vrot.slane %v576, %v582
        %s585 = scalar_lea.vmem [#allocation3], 2
        %586 = vst.msk [vmem:[%s585] ss:$8 sm:$0x3] %vm501, %v583
        %587 = vst.msk [vmem:[%s585] ss:$8 sm:$0x0] %vm501, %v583
        %588 = vrot.lane.b32.xlu0 %v455, 1
        %v589 = vpop.permute.xlu0 %588
        %590 = vrot.lane.b32.xlu0 %v456, 1
        %v591 = vpop.permute.xlu0 %590
        %vm592 = vcmp.lt.s32.totalorder %v464, 1
        %v593 = vsel %vm592, %v589, %v591
        %v594 = vsel %vm592, %v591, %v589
        %v595 = vlaneseq
        %v596 = vshrl.u32 %v595, 7
        %v597 = vsub.s32 3, %v596
        %v598 = vrot.slane %v379, %v597
        %v599 = vlaneseq
        %v600 = vshrl.u32 %v599, 7
        %v601 = vsub.s32 3, %v600
        %v602 = vrot.slane %v380, %v601
        %v603 = vmul.f32 %v594, %v598
        %v604 = vmul.f32 %v593, %v602
        %v607 = vrot.slane %v603, 4
        %v608 = vrot.slane %v604, 4
        %611 = vst [vmem:[#allocation2 + $0x10] sm:$0xf0] %v607
        %612 = vst [vmem:[#allocation2 + $0x18] sm:$0xf0] %v608
        %v613 = vcombine.high %v603, %v604
        %v615 = vunpack.c.l.s4 1966171168
        %v616 = vunpack.c.0.s8 %v615
        %v617 = vlaneseq
        %v618 = vshrl.u32 %v617, 7
        %v619 = vsub.s32 %v616, %v618
        %v620 = vrot.slane %v613, %v619
        %v622 = vunpack.c.l.s4 1966171168
        %v623 = vunpack.c.0.s8 %v622
        %v624 = vlaneseq
        %v625 = vshrl.u32 %v624, 7
        %v626 = vsub.s32 %v623, %v625
        %v627 = vrot.slane %v620, %v626
        %s629 = scalar_lea.vmem [#allocation3], 3
        %630 = vst.msk [vmem:[%s629] ss:$8 sm:$0x3] %vm501, %v627
        %631 = vst.msk [vmem:[%s629] ss:$8 sm:$0x0] %vm501, %v627
        %632 = vst [vmem:[#allocation2 + $0x20] sm:$0xf] %v455
        %633 = vst [vmem:[#allocation2 + $0x28] sm:$0xf] %v456
        %v634 = vcombine.high %v451, %v452
        %v636 = vunpack.c.l.s4 1966171168
        %v637 = vunpack.c.0.s8 %v636
        %v638 = vlaneseq
        %v639 = vshrl.u32 %v638, 7
        %v640 = vsub.s32 %v637, %v639
        %v641 = vrot.slane %v634, %v640
        %v643 = vunpack.c.l.s4 1966171168
        %v644 = vunpack.c.0.s8 %v643
        %v645 = vlaneseq
        %v646 = vshrl.u32 %v645, 7
        %v647 = vsub.s32 %v644, %v646
        %v648 = vrot.slane %v641, %v647
        %v649 = vcombine.high %v648, %v648
        %s651 = scalar_lea.vmem [#allocation3], 4
        %652 = vst.msk [vmem:[%s651] ss:$8 sm:$0x3] %vm501, %v649
        %653 = vst.msk [vmem:[%s651] ss:$8 sm:$0x0] %vm501, %v649
        %654 = vrot.lane.b32.xlu0 %v455, 127
        %v655 = vpop.permute.xlu0 %654
        %656 = vrot.lane.b32.xlu0 %v456, 127
        %v657 = vpop.permute.xlu0 %656
        %vm658 = vcmp.lt.s32.totalorder %v464, 127
        %v659 = vsel %vm658, %v655, %v657
        %v660 = vsel %vm658, %v657, %v655
        %v661 = vlaneseq
        %v662 = vshrl.u32 %v661, 7
        %v663 = vsub.s32 5, %v662
        %v664 = vrot.slane %v379, %v663
        %v665 = vlaneseq
        %v666 = vshrl.u32 %v665, 7
        %v667 = vsub.s32 5, %v666
        %v668 = vrot.slane %v380, %v667
        %v669 = vmul.f32 %v659, %v664
        %v670 = vmul.f32 %v660, %v668
        %v673 = vrot.slane %v669, 4
        %v674 = vrot.slane %v670, 4
        %677 = vst [vmem:[#allocation2 + $0x20] sm:$0xf0] %v673
        %678 = vst [vmem:[#allocation2 + $0x28] sm:$0xf0] %v674
        %v679 = vcombine.high %v669, %v670
        %v681 = vunpack.c.l.s4 1966171168
        %v682 = vunpack.c.0.s8 %v681
        %v683 = vlaneseq
        %v684 = vshrl.u32 %v683, 7
        %v685 = vsub.s32 %v682, %v684
        %v686 = vrot.slane %v679, %v685
        %v688 = vunpack.c.l.s4 1966171168
        %v689 = vunpack.c.0.s8 %v688
        %v690 = vlaneseq
        %v691 = vshrl.u32 %v690, 7
        %v692 = vsub.s32 %v689, %v691
        %v693 = vrot.slane %v686, %v692
        %s695 = scalar_lea.vmem [#allocation3], 5
        %696 = vst.msk [vmem:[%s695] ss:$8 sm:$0x3] %vm501, %v693
        %697 = vst.msk [vmem:[%s695] ss:$8 sm:$0x0] %vm501, %v693
        %698 = vrot.lane.b32.xlu0 %v455, 113
        %v699 = vpop.permute.xlu0 %698
        %700 = vrot.lane.b32.xlu0 %v456, 113
        %v701 = vpop.permute.xlu0 %700
        %vm702 = vcmp.lt.s32.totalorder %v464, 113
        %v703 = vsel %vm702, %v699, %v701
        %v704 = vsel %vm702, %v701, %v699
        %v705 = vlaneseq
        %v706 = vshrl.u32 %v705, 7
        %v707 = vsub.s32 6, %v706
        %v708 = vrot.slane %v379, %v707
        %v709 = vlaneseq
        %v710 = vshrl.u32 %v709, 7
        %v711 = vsub.s32 6, %v710
        %v712 = vrot.slane %v380, %v711
        %v713 = vmul.f32 %v703, %v708
        %v714 = vmul.f32 %v704, %v712
        %715 = vst [vmem:[#allocation2 + $0x30] sm:$0xf] %v713
        %716 = vst [vmem:[#allocation2 + $0x38] sm:$0xf] %v714
        %v719 = vcombine.high %v713, %v714
        %v721 = vunpack.c.l.s4 1966171168
        %v722 = vunpack.c.0.s8 %v721
        %v723 = vlaneseq
        %v724 = vshrl.u32 %v723, 7
        %v725 = vsub.s32 %v722, %v724
        %v726 = vrot.slane %v719, %v725
        %v728 = vunpack.c.l.s4 1966171168
        %v729 = vunpack.c.0.s8 %v728
        %v730 = vlaneseq
        %v731 = vshrl.u32 %v730, 7
        %v732 = vsub.s32 %v729, %v731
        %v733 = vrot.slane %v726, %v732
        %s735 = scalar_lea.vmem [#allocation3], 6
        %736 = vst.msk [vmem:[%s735] ss:$8 sm:$0x3] %vm501, %v733
        %737 = vst.msk [vmem:[%s735] ss:$8 sm:$0x0] %vm501, %v733
        %738 = vrot.lane.b32.xlu0 %v455, 112
        %v739 = vpop.permute.xlu0 %738
        %740 = vrot.lane.b32.xlu0 %v456, 112
        %v741 = vpop.permute.xlu0 %740
        %vm742 = vcmp.lt.s32.totalorder %v464, 112
        %v743 = vsel %vm742, %v739, %v741
        %v744 = vsel %vm742, %v741, %v739
        %v745 = vlaneseq
        %v746 = vshrl.u32 %v745, 7
        %v747 = vsub.s32 7, %v746
        %v748 = vrot.slane %v379, %v747
        %v749 = vlaneseq
        %v750 = vshrl.u32 %v749, 7
        %v751 = vsub.s32 7, %v750
        %v752 = vrot.slane %v380, %v751
        %v753 = vmul.f32 %v743, %v748
        %v754 = vmul.f32 %v744, %v752
        %v757 = vrot.slane %v753, 4
        %v758 = vrot.slane %v754, 4
        %761 = vst [vmem:[#allocation2 + $0x30] sm:$0xf0] %v757
        %762 = vst [vmem:[#allocation2 + $0x38] sm:$0xf0] %v758
        %v763 = vcombine.high %v753, %v754
        %v765 = vunpack.c.l.s4 1966171168
        %v766 = vunpack.c.0.s8 %v765
        %v767 = vlaneseq
        %v768 = vshrl.u32 %v767, 7
        %v769 = vsub.s32 %v766, %v768
        %v770 = vrot.slane %v763, %v769
        %v772 = vunpack.c.l.s4 1966171168
        %v773 = vunpack.c.0.s8 %v772
        %v774 = vlaneseq
        %v775 = vshrl.u32 %v774, 7
        %v776 = vsub.s32 %v773, %v775
        %v777 = vrot.slane %v770, %v776
        %s779 = scalar_lea.vmem [#allocation3], 7
        %780 = vst.msk [vmem:[%s779] ss:$8 sm:$0x3] %vm501, %v777
        %781 = vst.msk [vmem:[%s779] ss:$8 sm:$0x0] %vm501, %v777
        %782 = vrot.lane.b32.xlu0 %v455, 111
        %v783 = vpop.permute.xlu0 %782
        %784 = vrot.lane.b32.xlu0 %v456, 111
        %v785 = vpop.permute.xlu0 %784
        %vm786 = vcmp.lt.s32.totalorder %v464, 111
        %v787 = vsel %vm786, %v783, %v785
        %v788 = vsel %vm786, %v785, %v783
        %v789 = vlaneseq
        %v790 = vshrl.u32 %v789, 7
        %v791 = vsub.s32 0, %v790
        %v792 = vrot.slane %v381, %v791
        %v793 = vlaneseq
        %v794 = vshrl.u32 %v793, 7
        %v795 = vsub.s32 0, %v794
        %v796 = vrot.slane %v382, %v795
        %v797 = vmul.f32 %v787, %v792
        %v798 = vmul.f32 %v788, %v796
        %799 = vst [vmem:[#allocation2 + $0x40] sm:$0xf] %v797
        %800 = vst [vmem:[#allocation2 + $0x48] sm:$0xf] %v798
        %v803 = vcombine.high %v797, %v798
        %v805 = vunpack.c.l.s4 1966171168
        %v806 = vunpack.c.0.s8 %v805
        %v807 = vlaneseq
        %v808 = vshrl.u32 %v807, 7
        %v809 = vsub.s32 %v806, %v808
        %v810 = vrot.slane %v803, %v809
        %v812 = vunpack.c.l.s4 1966171168
        %v813 = vunpack.c.0.s8 %v812
        %v814 = vlaneseq
        %v815 = vshrl.u32 %v814, 7
        %v816 = vsub.s32 %v813, %v815
        %v817 = vrot.slane %v810, %v816
        %s819 = scalar_lea.vmem [#allocation3], 16
        %820 = vst.msk [vmem:[%s819] ss:$8 sm:$0x3] %vm501, %v817
        %821 = vst.msk [vmem:[%s819] ss:$8 sm:$0x0] %vm501, %v817
        %v822 = vld [vmem:[%s4] sm:$0x3]
        %v823 = vld [vmem:[#allocation2] sm:$0xff]
        %v824 = vld [vmem:[#allocation2 + $0x8] sm:$0xff]
        %v825 = vld [vmem:[#allocation2 + $0x10] sm:$0xff]
        %v826 = vld [vmem:[#allocation2 + $0x18] sm:$0xff]
        %v827 = vld [vmem:[#allocation2 + $0x20] sm:$0xff]
        %v828 = vld [vmem:[#allocation2 + $0x28] sm:$0xff]
        %v829 = vld [vmem:[#allocation2 + $0x30] sm:$0xff]
        %v830 = vld [vmem:[#allocation2 + $0x38] sm:$0xff]
        %v831 = vld [vmem:[#allocation2 + $0x40] sm:$0xf]
        %v832 = vld [vmem:[#allocation2 + $0x48] sm:$0xf]
        %v833 = vpack.c.bf16 %v825, %v823
        %v834 = vpack.c.bf16 %v826, %v824
        %v835 = vpack.c.bf16 %v829, %v827
        %v836 = vpack.c.bf16 %v830, %v828
        %v837 = vpack.c.bf16 %v831, %v831
        %v838 = vpack.c.bf16 %v832, %v832
        %v839 = vld [vmem:[%s5] sm:$0xf]
        %841 = vset.pattern.permute.xlu0 0
        %842 = vperm.xlu0 %841, %v839
        %v843 = vpop.permute.xlu0 %842
        %vm845 = vcmask 293888
        %v847 = vsel %vm845, %v822, 0
        %v850 = vsel %vm403, %v837, 0
        %v853 = vsel %vm403, %v838, 0
        %855 = vmatprep.subr.bf16.mxu0 %v834
        %856 = vmatpush1.bf16.msra.mxu0 %v833
        %857 = vmatprep.subr.bf16.mxu0 %v836
        %858 = vmatpush1.bf16.msra.mxu0 %v835
        %859 = vmatprep.subr.bf16.mxu0 %v853
        %860 = vmatpush1.bf16.msra.mxu0 %v850
        %861 = vmatprep.subr.bf16.mxu0 0
        %862 = vmatpush1.bf16.msra.mxu0 0
        %863 = vmatprep.subr.bf16.mxu0 0
        %864 = vmatpush1.bf16.msra.mxu0 0
        %865 = vmatprep.subr.bf16.mxu0 0
        %866 = vmatpush1.bf16.msra.mxu0 0
        %867 = vmatprep.subr.bf16.mxu0 0
        %868 = vmatpush1.bf16.msra.mxu0 0
        %869 = vmatprep.subr.bf16.mxu0 0
        %870 = vmatpush1.bf16.msra.mxu0 0
        %871 = vmatprep.subr.bf16.mxu0 0
        %872 = vmatpush1.bf16.msra.mxu0 0
        %873 = vmatprep.subr.bf16.mxu0 0
        %874 = vmatpush1.bf16.msra.mxu0 0
        %875 = vmatprep.subr.bf16.mxu0 0
        %876 = vmatpush1.bf16.msra.mxu0 0
        %877 = vmatprep.subr.bf16.mxu0 0
        %878 = vmatpush1.bf16.msra.mxu0 0
        %879 = vmatprep.subr.bf16.mxu0 0
        %880 = vmatpush1.bf16.msra.mxu0 0
        %881 = vmatprep.subr.bf16.mxu0 0
        %882 = vmatpush1.bf16.msra.mxu0 0
        %883 = vmatprep.subr.bf16.mxu0 0
        %884 = vmatpush1.bf16.msra.mxu0 0
        %885 = vmatprep.subr.bf16.mxu0 0
        %886 = vmatpush1.bf16.msra.mxu0 0
        %887 = vmatprep.mubr.bf16.mxu0 0
        %888 = vmatmul.mubr.bf16.gmra.mrb[0].mxu0 %v847
        %v889 = vpop.f32.mrb[0].mxu0
        %v890 = vadd.f32 %v843, %v889
        %v891 = vpop.f32.mrb[0].mxu0
        %v892 = vadd.f32 %v843, %v891
        %v893 = vpop.f32.mrb[0].mxu0
        %v894 = vpop.f32.mrb[0].mxu0
        %895 = vdwg.mxu0
        %v896 = vmax.f32 %v890, 0.0
        %v897 = vmax.f32 %v892, 0.0
        %v898 = vld [vmem:[%s6] sm:$0x1]
        %v899 = vld [vmem:[#allocation3] sm:$0xff]
        %v900 = vld [vmem:[#allocation3 + $0x8] sm:$0xff]
        %v901 = vld [vmem:[#allocation3 + $0x10] sm:$0x1]
        %v902 = vld [vmem:[#allocation3 + $0x18] sm:$0x1]
        %v903 = vpack.c.bf16 %v901, %v899
        %v904 = vpack.c.bf16 %v902, %v900
        %v905 = vld [vmem:[#allocation4] sm:$0x1]
        %907 = vset.pattern.permute.xlu0 0
        %908 = vperm.xlu0 %907, %v905
        %v909 = vpop.permute.xlu0 %908
        %v911 = vlaneseq
        %v912 = vshrl.u32 %v911, 7
        %v913 = vsub.s32 0, %v912
        %v914 = vrot.slane %v909, %v913
        %vm915 = vcmask 72704
        %v917 = vsel %vm915, %v898, 0
        %vm919 = vcmask 1043456
        %vm920 = vcmask 1044480
        %v921 = vsel %vm919, 4294967295, 65535
        %v922 = vsel %vm920, %v921, 0
        %v924 = vand.u32 %v903, %v922
        %v927 = vand.u32 %v904, %v922
        %929 = vmatprep.subr.bf16.mxu0 %v927
        %930 = vmatpush1.bf16.msra.mxu0 %v924
        %931 = vmatprep.subr.bf16.mxu0 0
        %932 = vmatpush1.bf16.msra.mxu0 0
        %933 = vmatprep.subr.bf16.mxu0 0
        %934 = vmatpush1.bf16.msra.mxu0 0
        %935 = vmatprep.subr.bf16.mxu0 0
        %936 = vmatpush1.bf16.msra.mxu0 0
        %937 = vmatprep.subr.bf16.mxu0 0
        %938 = vmatpush1.bf16.msra.mxu0 0
        %939 = vmatprep.subr.bf16.mxu0 0
        %940 = vmatpush1.bf16.msra.mxu0 0
        %941 = vmatprep.subr.bf16.mxu0 0
        %942 = vmatpush1.bf16.msra.mxu0 0
        %943 = vmatprep.subr.bf16.mxu0 0
        %944 = vmatpush1.bf16.msra.mxu0 0
        %945 = vmatprep.subr.bf16.mxu0 0
        %946 = vmatpush1.bf16.msra.mxu0 0
        %947 = vmatprep.subr.bf16.mxu0 0
        %948 = vmatpush1.bf16.msra.mxu0 0
        %949 = vmatprep.subr.bf16.mxu0 0
        %950 = vmatpush1.bf16.msra.mxu0 0
        %951 = vmatprep.subr.bf16.mxu0 0
        %952 = vmatpush1.bf16.msra.mxu0 0
        %953 = vmatprep.subr.bf16.mxu0 0
        %954 = vmatpush1.bf16.msra.mxu0 0
        %955 = vmatprep.subr.bf16.mxu0 0
        %956 = vmatpush1.bf16.msra.mxu0 0
        %957 = vmatprep.subr.bf16.mxu0 0
        %958 = vmatpush1.bf16.msra.mxu0 0
        %959 = vmatprep.subr.bf16.mxu0 0
        %960 = vmatpush1.bf16.msra.mxu0 0
        %961 = vmatprep.mubr.bf16.mxu0 0
        %962 = vmatmul.mubr.bf16.gmra.mrb[0].mxu0 %v917
        %v963 = vpop.f32.mrb[0].mxu0
        %v964 = vadd.f32 %v914, %v963
        %v965 = vpop.f32.mrb[0].mxu0
        %v966 = vadd.f32 %v914, %v965
        %v967 = vpop.f32.mrb[0].mxu0
        %v968 = vpop.f32.mrb[0].mxu0
        %969 = vdwg.mxu0
        %v970 = vmax.f32 %v964, 0.0
        %v971 = vmax.f32 %v966, 0.0
        %v972 = vunpack.c.l.bf16 %v378
        %vm973 = vcmp.gt.f32.partialorder %v379, 0.5
        %vm974 = vcmp.gt.f32.partialorder %v380, 0.5
        %v976 = vcombine.high %v972, %v972
        %978 = vrot.lane.b32.xlu0 %v972, 16
        %v979 = vpop.permute.xlu0 %978
        %980 = vrot.lane.b32.xlu0 %v976, 16
        %v981 = vpop.permute.xlu0 %980
        %v982 = vsel %vm508, %v979, %v981
        %v983 = vsel %vm508, %v981, %v979
        %v984 = vsel %vm973, 1, 0
        %v985 = vsel %vm974, 1, 0
        %v986 = vlaneseq
        %v987 = vshrl.u32 %v986, 7
        %v988 = vsub.s32 1, %v987
        %v989 = vrot.slane %v984, %v988
        %v990 = vlaneseq
        %v991 = vshrl.u32 %v990, 7
        %v992 = vsub.s32 1, %v991
        %v993 = vrot.slane %v985, %v992
        %vm994 = vcmp.eq.s32.totalorder %v989, 1
        %vm995 = vcmp.eq.s32.totalorder %v993, 1
        %v996 = vsel %vm994, %v983, -inf
        %v997 = vsel %vm995, %v982, -inf
        %998 = vrot.lane.b32.xlu0 %v972, 112
        %v999 = vpop.permute.xlu0 %998
        %1000 = vrot.lane.b32.xlu0 %v976, 112
        %v1001 = vpop.permute.xlu0 %1000
        %v1002 = vsel %vm742, %v999, %v1001
        %v1003 = vsel %vm742, %v1001, %v999
        %v1004 = vlaneseq
        %v1005 = vshrl.u32 %v1004, 7
        %v1006 = vsub.s32 7, %v1005
        %v1007 = vrot.slane %v984, %v1006
        %v1008 = vlaneseq
        %v1009 = vshrl.u32 %v1008, 7
        %v1010 = vsub.s32 7, %v1009
        %v1011 = vrot.slane %v985, %v1010
        %vm1012 = vcmp.eq.s32.totalorder %v1007, 1
        %vm1013 = vcmp.eq.s32.totalorder %v1011, 1
        %v1014 = vsel %vm1012, %v1002, -inf
        %v1015 = vsel %vm1013, %v1003, -inf
        %v1016 = vmax.f32 %v996, %v1014
        %v1017 = vmax.f32 %v997, %v1015
        %v1020 = vcombine.low %v1016, %v1017
        %v1022 = vmax.f32 %v972, %v1020
        %v1024 = vcombine.high %v1022, %v1022
        %1026 = vrot.lane.b32.xlu0 %v1022, 1
        %v1027 = vpop.permute.xlu0 %1026
        %1028 = vrot.lane.b32.xlu0 %v1024, 1
        %v1029 = vpop.permute.xlu0 %1028
        %v1030 = vsel %vm592, %v1027, %v1029
        %v1031 = vsel %vm592, %v1029, %v1027
        %v1032 = vlaneseq
        %v1033 = vshrl.u32 %v1032, 7
        %v1034 = vsub.s32 3, %v1033
        %v1035 = vrot.slane %v984, %v1034
        %v1036 = vlaneseq
        %v1037 = vshrl.u32 %v1036, 7
        %v1038 = vsub.s32 3, %v1037
        %v1039 = vrot.slane %v985, %v1038
        %vm1040 = vcmp.eq.s32.totalorder %v1035, 1
        %vm1041 = vcmp.eq.s32.totalorder %v1039, 1
        %v1042 = vsel %vm1040, %v1031, -inf
        %v1043 = vsel %vm1041, %v1030, -inf
        %1044 = vrot.lane.b32.xlu0 %v1022, 127
        %v1045 = vpop.permute.xlu0 %1044
        %1046 = vrot.lane.b32.xlu0 %v1024, 127
        %v1047 = vpop.permute.xlu0 %1046
        %v1048 = vsel %vm658, %v1045, %v1047
        %v1049 = vsel %vm658, %v1047, %v1045
        %v1050 = vlaneseq
        %v1051 = vshrl.u32 %v1050, 7
        %v1052 = vsub.s32 5, %v1051
        %v1053 = vrot.slane %v984, %v1052
        %v1054 = vlaneseq
        %v1055 = vshrl.u32 %v1054, 7
        %v1056 = vsub.s32 5, %v1055
        %v1057 = vrot.slane %v985, %v1056
        %vm1058 = vcmp.eq.s32.totalorder %v1053, 1
        %vm1059 = vcmp.eq.s32.totalorder %v1057, 1
        %v1060 = vsel %vm1058, %v1048, -inf
        %v1061 = vsel %vm1059, %v1049, -inf
        %v1062 = vmax.f32 %v1042, %v1060
        %v1063 = vmax.f32 %v1043, %v1061
        %v1066 = vcombine.low %v1062, %v1063
        %v1068 = vmax.f32 %v1022, %v1066
        %v1069 = vld [vmem:[%s8] sm:$0x1]
        %v1071 = vcombine.high %v1068, %v1068
        %v1073 = vpack.c.bf16 %v1068, %v1068
        %v1074 = vpack.c.bf16 %v1071, %v1071
        %v1075 = vld [vmem:[#allocation5] sm:$0x1]
        %1077 = vset.pattern.permute.xlu0 0
        %1078 = vperm.xlu0 %1077, %v1075
        %v1079 = vpop.permute.xlu0 %1078
        %v1081 = vlaneseq
        %v1082 = vshrl.u32 %v1081, 7
        %v1083 = vsub.s32 0, %v1082
        %v1084 = vrot.slane %v1079, %v1083
        %v1086 = vsel %vm399, %v1069, 0
        %v1089 = vsel %vm403, %v1073, 0
        %v1092 = vsel %vm403, %v1074, 0
        %1094 = vmatprep.subr.bf16.mxu0 %v1092
        %1095 = vmatpush1.bf16.msra.mxu0 %v1089
        %1096 = vmatprep.subr.bf16.mxu0 0
        %1097 = vmatpush1.bf16.msra.mxu0 0
        %1098 = vmatprep.subr.bf16.mxu0 0
        %1099 = vmatpush1.bf16.msra.mxu0 0
        %1100 = vmatprep.subr.bf16.mxu0 0
        %1101 = vmatpush1.bf16.msra.mxu0 0
        %1102 = vmatprep.subr.bf16.mxu0 0
        %1103 = vmatpush1.bf16.msra.mxu0 0
        %1104 = vmatprep.subr.bf16.mxu0 0
        %1105 = vmatpush1.bf16.msra.mxu0 0
        %1106 = vmatprep.subr.bf16.mxu0 0
        %1107 = vmatpush1.bf16.msra.mxu0 0
        %1108 = vmatprep.subr.bf16.mxu0 0
        %1109 = vmatpush1.bf16.msra.mxu0 0
        %1110 = vmatprep.subr.bf16.mxu0 0
        %1111 = vmatpush1.bf16.msra.mxu0 0
        %1112 = vmatprep.subr.bf16.mxu0 0
        %1113 = vmatpush1.bf16.msra.mxu0 0
        %1114 = vmatprep.subr.bf16.mxu0 0
        %1115 = vmatpush1.bf16.msra.mxu0 0
        %1116 = vmatprep.subr.bf16.mxu0 0
        %1117 = vmatpush1.bf16.msra.mxu0 0
        %1118 = vmatprep.subr.bf16.mxu0 0
        %1119 = vmatpush1.bf16.msra.mxu0 0
        %1120 = vmatprep.subr.bf16.mxu0 0
        %1121 = vmatpush1.bf16.msra.mxu0 0
        %1122 = vmatprep.subr.bf16.mxu0 0
        %1123 = vmatpush1.bf16.msra.mxu0 0
        %1124 = vmatprep.subr.bf16.mxu0 0
        %1125 = vmatpush1.bf16.msra.mxu0 0
        %1126 = vmatprep.mubr.bf16.mxu0 0
        %1127 = vmatmul.mubr.bf16.gmra.mrb[0].mxu0 %v1086
        %v1128 = vpop.f32.mrb[0].mxu0
        %v1129 = vadd.f32 %v1084, %v1128
        %v1130 = vpop.f32.mrb[0].mxu0
        %v1131 = vadd.f32 %v1084, %v1130
        %v1132 = vpop.f32.mrb[0].mxu0
        %v1133 = vpop.f32.mrb[0].mxu0
        %1134 = vdwg.mxu0
        %v1135 = vmax.f32 %v1129, 0.0
        %v1136 = vmax.f32 %v1131, 0.0
        %1137 = vst [vmem:[%s371] sm:$0x3] %v451
        %1138 = vst [vmem:[%s371 + $0x8] sm:$0x3] %v452
        %v1141 = vrot.slane %v896, 6
        %v1142 = vrot.slane %v897, 6
        %1145 = vst [vmem:[%s371] sm:$0x3c] %v1141
        %1146 = vst [vmem:[%s371 + $0x8] sm:$0x3c] %v1142
        %v1149 = vcombine.low %v970, %v971
        %v1151 = vunpack.c.l.s4 1966171168
        %v1152 = vunpack.c.0.s8 %v1151
        %v1153 = vlaneseq
        %v1154 = vshrl.u32 %v1153, 7
        %v1155 = vsub.s32 %v1152, %v1154
        %v1156 = vrot.slane %v1149, %v1155
        %v1158 = vunpack.c.l.s4 1966171168
        %v1159 = vunpack.c.0.s8 %v1158
        %v1160 = vlaneseq
        %v1161 = vshrl.u32 %v1160, 7
        %v1162 = vsub.s32 %v1159, %v1161
        %v1163 = vrot.slane %v1156, %v1162
        %s1165 = scalar_lea.vmem %s371, 6 [#allocation9]
        %1166 = vst.msk [vmem:[%s1165] ss:$8 sm:$0x3] %vm501, %v1163
        %1167 = vst.msk [vmem:[%s1165] ss:$8 sm:$0x0] %vm501, %v1163
        %v1170 = vcombine.low %v1135, %v1136
        %v1172 = vunpack.c.l.s4 1966171168
        %v1173 = vunpack.c.0.s8 %v1172
        %v1174 = vlaneseq
        %v1175 = vshrl.u32 %v1174, 7
        %v1176 = vsub.s32 %v1173, %v1175
        %v1177 = vrot.slane %v1170, %v1176
        %v1179 = vunpack.c.l.s4 1966171168
        %v1180 = vunpack.c.0.s8 %v1179
        %v1181 = vlaneseq
        %v1182 = vshrl.u32 %v1181, 7
        %v1183 = vsub.s32 %v1180, %v1182
        %v1184 = vrot.slane %v1177, %v1183
        %s1186 = scalar_lea.vmem %s371, 7 [#allocation9]
        %1187 = vst.msk [vmem:[%s1186] ss:$8 sm:$0x3] %vm501, %v1184
        %1188 = vst.msk [vmem:[%s1186] ss:$8 sm:$0x0] %vm501, %v1184
        %s1189 = sand.u32 %s252, 1
        %s1190 = scalar_lea.sflag [#allocation8], %s1189
        %s1191 = sand.u32 %s252, 1
        %s1192 = smul.addr %s1191, 16
        %s1193 = scalar_lea.vmem [#allocation9], %s1192
        // Predicated region
        $region65: #{tpu_custom_call.1} parent=59 // pred_check
          %p1194 = pneg %p262
        $region66: #{tpu_custom_call.1} parent=59 // pred_check_branch
          %1196 = sbr.rel (%p1194) target = $region68
        $region67: #{tpu_custom_call.1} parent=59 // pred_region
          %s1198 = ssub.s32 256, 256
          %1199 = vsyncadd %s1190, %s1198
          %s1200 = smul.addr %s29, 2
          %s1201 = smul.addr %s1200, 128
          %s1202 = scalar_lea.hbm %s10, %s1201
          %s1204 = sshll.u32 %s1193, 4
          %s1205 = int_to_ptr.vmem [resolvable:$true] %s1204
          %1207 = dma.vmem_to_hbm [thread:$0]  %s1205, 256, %s1202, %s1190
        $region68: #{tpu_custom_call.1} parent=59 // pred_fallthru
          _
      $region60: #{tpu_custom_call.1} parent=5 // pred_fallthru
        _
      %p1208 = scmp.le.s32.totalorder 2, %s24
      // Predicated region
      $region69: #{tpu_custom_call.1} parent=5 // pred_check
        %p1209 = pneg %p1208
      $region70: #{tpu_custom_call.1} parent=5 // pred_check_branch
        %1211 = sbr.rel (%p1209) target = $region72
      $region71: #{tpu_custom_call.1} parent=5 // pred_region
        %s1212 = ssub.s32 %s24, 2
        // Predicated region
        $region73: #{tpu_custom_call.1} parent=71 // pred_check
          %p1213 = pneg %p268
        $region74: #{tpu_custom_call.1} parent=71 // pred_check_branch
          %1215 = sbr.rel (%p1213) target = $region76
        $region75: #{tpu_custom_call.1} parent=71 // pred_region
          %s1216 = sand.u32 %s253, 1
          %s1217 = scalar_lea.sflag [#allocation8], %s1216
          %s1218 = sand.u32 %s253, 1
          %s1219 = smul.addr %s1218, 16
          %s1220 = scalar_lea.vmem [#allocation9], %s1219
          %1221 = dma.done %s1217, 256
        $region76: #{tpu_custom_call.1} parent=71 // pred_fallthru
          _
      $region72: #{tpu_custom_call.1} parent=5 // pred_fallthru
        _
    $region6: #{tpu_custom_call.1} parent=1 // loop_footer
      %s28 = sadd.s32 1, %s24
    $region7: #{tpu_custom_call.1} parent=1 // loop_footer_branch
      %23 = sbr.rel target = $region3
    $region8: #{tpu_custom_call.1} parent=1 // loop_exit
      _
    %1222 = vsyncpa [#allocation7], 1
    %s1223 = scalar_lea.sflag [#allocation7], 1
    %1224 = vsyncpa %s1223, 1
    %1225 = vsyncpa [#allocation8], 1
    %s1226 = scalar_lea.sflag [#allocation8], 1
    %1227 = vsyncpa %s1226, 1

</llo_original>
